<compile_context>
chip_gen: v6e
topology: v6e:2x2x1
jax: 0.10.0
libtpu: 0.0.40
codegen_flags: <defaults>
</compile_context>

<pallas_src>
import functools

import jax
import jax.numpy as jnp
from jax import lax
from jax.experimental import pallas as pl
from jax.experimental.pallas import tpu as pltpu


# -----------------------------------------------------------------------------
# BreakBlock: the module under test.
# -----------------------------------------------------------------------------
def break_block(x):
    """Equivalent of BreakBlock.forward(x): returns None (connection break)."""
    # TODO(synk): BreakBlock.forward has no tensor computation (returns None),
    # so there is no Pallas kernel to emit for this module itself.
    del x
    return None


# -----------------------------------------------------------------------------
# Fused (inference) BatchNorm -> ReLU -> Conv2d Pallas kernel.
# One grid step = one batch element. Channel-major, NCHW in / NCHW out.
# -----------------------------------------------------------------------------
def _pre_conv_block_kernel(x_ref, scale_ref, shift_ref, w_ref, o_ref,
                           pad_ref, col_ref, *, kh, kw, stride, dilation,
                           padding, out_hw, k_total):
    """
    x_ref:     (Cin, H, W)           one batch element (NCHW, squeezed N)
    scale_ref: (Cin, 1, 1)           gamma / sqrt(var + eps)
    shift_ref: (Cin, 1, 1)           beta - mean * scale
    w_ref:     (Cout, K_pad)         bf16 weights, rows [K:] are exact zeros
    o_ref:     (Cout, OH*OW)         lane-dense channel-major output tile
    pad_ref:   (Cin, H+2ph, W+2pw)   f32 VMEM scratch (zero halo + activation)
    col_ref:   (K_pad, OH*OW)        bf16 im2col scratch (lane-dense rows)
    """
    Cin, H, W = x_ref.shape
    sh, sw = stride
    dh, dw = dilation
    ph, pw = padding
    OH, OW = out_hw
    Wp = W + 2 * pw

    # ---- folded BatchNorm (eval) + ReLU on the VPU, in f32 ----
    a = jnp.maximum(
        x_ref[...].astype(jnp.float32) * scale_ref[...] + shift_ref[...], 0.0)

    # ---- zero only the halo strips; the interior is fully overwritten ----
    if ph > 0:
        pad_ref[:, :ph, :] = jnp.zeros((Cin, ph, Wp), jnp.float32)
        pad_ref[:, H + ph:, :] = jnp.zeros((Cin, ph, Wp), jnp.float32)
    if pw > 0:
        pad_ref[:, ph:ph + H, :pw] = jnp.zeros((Cin, H, pw), jnp.float32)
        pad_ref[:, ph:ph + H, W + pw:] = jnp.zeros((Cin, H, pw), jnp.float32)
    pad_ref[:, ph:ph + H, pw:pw + W] = a
    a_pad = pad_ref[...]

    # ---- keep the K-padding tail exactly zero (weight rows there are zero,
    #      but uninitialized VMEM could hold NaN/Inf bit patterns) ----
    k_pad = col_ref.shape[0]
    if k_pad > k_total:
        col_ref[k_total:, :] = jnp.zeros((k_pad - k_total, OH * OW),
                                         col_ref.dtype)

    # ---- im2col, channel-major: row = tap*Cin + ci, 256 lane-dense cols ----
    for i in range(kh):                      # static loop over kernel taps
        for j in range(kw):
            h0, w0 = i * dh, j * dw
            patch = lax.slice(
                a_pad,
                (0, h0, w0),
                (Cin, h0 + (OH - 1) * sh + 1, w0 + (OW - 1) * sw + 1),
                (1, sh, sw))                 # (Cin, OH, OW)
            tap = i * kw + j
            col_ref[tap * Cin:(tap + 1) * Cin, :] = (
                patch.reshape(Cin, OH * OW).astype(col_ref.dtype))

    # ---- single full-depth MXU contraction: (Cout,Kp) x (Kp,OH*OW) ----
    acc = jnp.dot(w_ref[...], col_ref[...],
                  preferred_element_type=jnp.float32)   # (Cout, OH*OW) f32
    o_ref[...] = acc.astype(o_ref.dtype)


def pre_conv_block(x_nchw, conv_weight, bn_gamma, bn_beta, bn_mean, bn_var, *,
                   stride=(1, 1), padding=(1, 1), dilation=(1, 1), eps=1e-5):
    """JAX/Pallas wrapper for BN(eval) -> ReLU -> Conv2d (bias=False), NCHW.

    x_nchw:      (N, Cin, H, W)
    conv_weight: (Cout, Cin, KH, KW)   (PyTorch OIHW)
    bn_*:        (Cin,)
    """
    N, Cin, H, W = x_nchw.shape
    Cout, Cin_w, KH, KW = conv_weight.shape
    assert Cin_w == Cin
    sh, sw = stride
    ph, pw = padding
    dh, dw = dilation
    OH = (H + 2 * ph - dh * (KH - 1) - 1) // sh + 1
    OW = (W + 2 * pw - dw * (KW - 1) - 1) // sw + 1

    # contraction depth padded to a multiple of 128 (full MXU passes)
    K = KH * KW * Cin
    K_pad = max(128, ((K + 127) // 128) * 128)

    # glue (no layout transposes): fold BN params; build bf16 im2col weights.
    inv = bn_gamma / jnp.sqrt(bn_var + eps)
    scale = inv.reshape(Cin, 1, 1).astype(jnp.float32)
    shift = (bn_beta - bn_mean * inv).reshape(Cin, 1, 1).astype(jnp.float32)

    # OIHW -> (Cout, KH*KW*Cin), tap-major / Cin-minor row order matching the
    # im2col rows built in the kernel; padded K rows are exact zeros.
    w2d = jnp.transpose(conv_weight, (0, 2, 3, 1)).reshape(Cout, K)
    w2d = jnp.pad(w2d, ((0, 0), (0, K_pad - K))).astype(jnp.bfloat16)

    kernel = functools.partial(
        _pre_conv_block_kernel,
        kh=KH, kw=KW, stride=(sh, sw), dilation=(dh, dw), padding=(ph, pw),
        out_hw=(OH, OW), k_total=K)

    out = pl.pallas_call(
        kernel,
        out_shape=jax.ShapeDtypeStruct((N, Cout, OH * OW), x_nchw.dtype),
        grid=(N,),
        in_specs=[
            pl.BlockSpec((None, Cin, H, W), lambda n: (n, 0, 0, 0)),
            pl.BlockSpec((Cin, 1, 1), lambda n: (0, 0, 0)),
            pl.BlockSpec((Cin, 1, 1), lambda n: (0, 0, 0)),
            pl.BlockSpec((Cout, K_pad), lambda n: (0, 0)),
        ],
        out_specs=pl.BlockSpec((None, Cout, OH * OW), lambda n: (n, 0, 0)),
        scratch_shapes=[
            pltpu.VMEM((Cin, H + 2 * ph, W + 2 * pw), jnp.float32),
            pltpu.VMEM((K_pad, OH * OW), jnp.bfloat16),
        ],
        compiler_params=pltpu.CompilerParams(
            dimension_semantics=("parallel",),
            vmem_limit_bytes=32 * 1024 * 1024),
    )(x_nchw, scale, shift, w2d)

    # metadata-only reshape: result is already channel-major NCHW.
    return out.reshape(N, Cout, OH, OW)


def _reference(x, w, gamma, beta, mean, var, eps, stride, padding, dilation):
    inv = gamma / jnp.sqrt(var + eps)
    a = (x - mean[None, :, None, None]) * inv[None, :, None, None] \
        + beta[None, :, None, None]
    a = jnp.maximum(a, 0.0)
    return lax.conv_general_dilated(
        a, w, window_strides=stride,
        padding=((padding[0], padding[0]), (padding[1], padding[1])),
        rhs_dilation=dilation,
        dimension_numbers=('NCHW', 'OIHW', 'NCHW'))


if __name__ == "__main__":
    key = jax.random.PRNGKey(0)
    kx, kw_, kg, kb, km, kv = jax.random.split(key, 6)

    # Shapes consistent with the module usage: NCHW feature map.
    N, Cin, H, W = 2, 4, 16, 16
    x = jax.random.normal(kx, (N, Cin, H, W), dtype=jnp.float32)

    # ---- BreakBlock (the module spec): forward(x) -> None ----
    out = break_block(x)
    assert out is None, "BreakBlock.forward must return None"

    # ---- carried-over fused BN->ReLU->Conv kernel (improved per review) ----
    Cout, KH, KW = 8, 3, 3
    conv_w = 0.1 * jax.random.normal(kw_, (Cout, Cin, KH, KW), jnp.float32)
    gamma = 1.0 + 0.1 * jax.random.normal(kg, (Cin,), jnp.float32)
    beta = 0.1 * jax.random.normal(kb, (Cin,), jnp.float32)
    run_mean = 0.1 * jax.random.normal(km, (Cin,), jnp.float32)
    run_var = 0.5 + jnp.abs(jax.random.normal(kv, (Cin,), jnp.float32))

    y = pre_conv_block(x, conv_w, gamma, beta, run_mean, run_var,
                       stride=(1, 1), padding=(1, 1), dilation=(1, 1),
                       eps=1e-5)
    y = jax.block_until_ready(y)

    y_ref = _reference(x, conv_w, gamma, beta, run_mean, run_var, 1e-5,
                       (1, 1), (1, 1), (1, 1))
    assert y.shape == (N, Cout, H, W)
    max_err = float(jnp.max(jnp.abs(y - y_ref)))
    # bf16 matmul operands with f32 accumulation -> bf16-appropriate tolerance.
    assert jnp.allclose(y, y_ref, atol=2e-2, rtol=2e-2), f"max err {max_err}"

    print("KERNEL_OK")
</pallas_src>

<mosaic_0001>
module attributes {stable_mosaic.version = 11 : i64} {
  func.func @_pre_conv_block_kernel(%arg0: i32, %arg1: memref<1x4x16x16xf32, #tpu.memory_space<vmem>>, %arg2: memref<4x1x1xf32, #tpu.memory_space<vmem>>, %arg3: memref<4x1x1xf32, #tpu.memory_space<vmem>>, %arg4: memref<8x128xbf16, #tpu.memory_space<vmem>>, %arg5: memref<1x8x256xf32, #tpu.memory_space<vmem>>, %arg6: memref<4x18x18xf32, #tpu.memory_space<vmem>>, %arg7: memref<128x256xbf16, #tpu.memory_space<vmem>>) attributes {dimension_semantics = [#tpu.dimension_semantics<parallel>], iteration_bounds = array<i64: 2>, scalar_prefetch = 0 : i64, scratch_operands = 2 : i64, tpu.core_type = #tpu.core_type<tc>, window_params = [{transform_indices = @transform_0, window_bounds = array<i64: 1, 4, 16, 16>}, {pipeline_mode = #tpu.pipeline_mode<synchronous>, transform_indices = @transform_1, window_bounds = array<i64: 4, 1, 1>}, {pipeline_mode = #tpu.pipeline_mode<synchronous>, transform_indices = @transform_2, window_bounds = array<i64: 4, 1, 1>}, {pipeline_mode = #tpu.pipeline_mode<synchronous>, transform_indices = @transform_3, window_bounds = array<i64: 8, 128>}, {transform_indices = @transform_4, window_bounds = array<i64: 1, 8, 256>}]} {
    %c0 = arith.constant 0 : index
    %c0_0 = arith.constant 0 : index
    %c0_1 = arith.constant 0 : index
    %c0_2 = arith.constant 0 : index
    %0 = vector.load %arg1[%c0, %c0_0, %c0_1, %c0_2] : memref<1x4x16x16xf32, #tpu.memory_space<vmem>>, vector<1x4x16x16xf32>
    %1 = vector.shape_cast %0 : vector<1x4x16x16xf32> to vector<4x16x16xf32>
    %c0_3 = arith.constant 0 : index
    %c0_4 = arith.constant 0 : index
    %c0_5 = arith.constant 0 : index
    %2 = vector.load %arg2[%c0_3, %c0_4, %c0_5] : memref<4x1x1xf32, #tpu.memory_space<vmem>>, vector<4x1x1xf32>
    %3 = vector.broadcast %2 : vector<4x1x1xf32> to vector<4x16x16xf32>
    %4 = arith.mulf %1, %3 : vector<4x16x16xf32>
    %c0_6 = arith.constant 0 : index
    %c0_7 = arith.constant 0 : index
    %c0_8 = arith.constant 0 : index
    %5 = vector.load %arg3[%c0_6, %c0_7, %c0_8] : memref<4x1x1xf32, #tpu.memory_space<vmem>>, vector<4x1x1xf32>
    %6 = vector.broadcast %5 : vector<4x1x1xf32> to vector<4x16x16xf32>
    %7 = arith.addf %4, %6 : vector<4x16x16xf32>
    %cst = arith.constant 0.000000e+00 : f32
    %8 = vector.broadcast %cst : f32 to vector<4x16x16xf32>
    %9 = arith.maximumf %7, %8 : vector<4x16x16xf32>
    %cst_9 = arith.constant 0.000000e+00 : f32
    %10 = vector.broadcast %cst_9 : f32 to vector<4x1x18xf32>
    %c0_10 = arith.constant 0 : index
    %c0_11 = arith.constant 0 : index
    %c0_12 = arith.constant 0 : index
    %11 = vector.load %arg6[%c0_10, %c0_11, %c0_12] : memref<4x18x18xf32, #tpu.memory_space<vmem>>, vector<4x1x18xf32>
    tpu.vector_store %arg6[%c0_10, %c0_11, %c0_12], %10 {strides = array<i32>} : memref<4x18x18xf32, #tpu.memory_space<vmem>>, vector<4x1x18xf32>,
    %cst_13 = arith.constant 0.000000e+00 : f32
    %12 = vector.broadcast %cst_13 : f32 to vector<4x1x18xf32>
    %c0_14 = arith.constant 0 : index
    %c17 = arith.constant 17 : index
    %c0_15 = arith.constant 0 : index
    %13 = vector.load %arg6[%c0_14, %c17, %c0_15] : memref<4x18x18xf32, #tpu.memory_space<vmem>>, vector<4x1x18xf32>
    tpu.vector_store %arg6[%c0_14, %c17, %c0_15], %12 {strides = array<i32>} : memref<4x18x18xf32, #tpu.memory_space<vmem>>, vector<4x1x18xf32>,
    %cst_16 = arith.constant 0.000000e+00 : f32
    %14 = vector.broadcast %cst_16 : f32 to vector<4x16x1xf32>
    %c0_17 = arith.constant 0 : index
    %c1 = arith.constant 1 : index
    %c0_18 = arith.constant 0 : index
    %15 = vector.load %arg6[%c0_17, %c1, %c0_18] : memref<4x18x18xf32, #tpu.memory_space<vmem>>, vector<4x16x1xf32>
    tpu.vector_store %arg6[%c0_17, %c1, %c0_18], %14 {strides = array<i32>} : memref<4x18x18xf32, #tpu.memory_space<vmem>>, vector<4x16x1xf32>,
    %cst_19 = arith.constant 0.000000e+00 : f32
    %16 = vector.broadcast %cst_19 : f32 to vector<4x16x1xf32>
    %c0_20 = arith.constant 0 : index
    %c1_21 = arith.constant 1 : index
    %c17_22 = arith.constant 17 : index
    %17 = vector.load %arg6[%c0_20, %c1_21, %c17_22] : memref<4x18x18xf32, #tpu.memory_space<vmem>>, vector<4x16x1xf32>
    tpu.vector_store %arg6[%c0_20, %c1_21, %c17_22], %16 {strides = array<i32>} : memref<4x18x18xf32, #tpu.memory_space<vmem>>, vector<4x16x1xf32>,
    %c0_23 = arith.constant 0 : index
    %c1_24 = arith.constant 1 : index
    %c1_25 = arith.constant 1 : index
    %18 = vector.load %arg6[%c0_23, %c1_24, %c1_25] : memref<4x18x18xf32, #tpu.memory_space<vmem>>, vector<4x16x16xf32>
    tpu.vector_store %arg6[%c0_23, %c1_24, %c1_25], %9 {strides = array<i32>} : memref<4x18x18xf32, #tpu.memory_space<vmem>>, vector<4x16x16xf32>,
    %c0_26 = arith.constant 0 : index
    %c0_27 = arith.constant 0 : index
    %c0_28 = arith.constant 0 : index
    %19 = vector.load %arg6[%c0_26, %c0_27, %c0_28] : memref<4x18x18xf32, #tpu.memory_space<vmem>>, vector<4x18x18xf32>
    %cst_29 = arith.constant 0.000000e+00 : bf16
    %20 = vector.broadcast %cst_29 : bf16 to vector<92x256xbf16>
    %c36 = arith.constant 36 : index
    %c0_30 = arith.constant 0 : index
    %21 = vector.load %arg7[%c36, %c0_30] : memref<128x256xbf16, #tpu.memory_space<vmem>>, vector<92x256xbf16>
    tpu.vector_store %arg7[%c36, %c0_30], %20 {strides = array<i32>} : memref<128x256xbf16, #tpu.memory_space<vmem>>, vector<92x256xbf16>,
    %22 = vector.extract_strided_slice %19 {offsets = [0, 0, 0], sizes = [4, 16, 16], strides = [1, 1, 1]} : vector<4x18x18xf32> to vector<4x16x16xf32>
    %23 = vector.shape_cast %22 : vector<4x16x16xf32> to vector<4x256xf32>
    %24 = arith.truncf %23 : vector<4x256xf32> to vector<4x256xbf16>
    %c0_31 = arith.constant 0 : index
    %c0_32 = arith.constant 0 : index
    %25 = vector.load %arg7[%c0_31, %c0_32] : memref<128x256xbf16, #tpu.memory_space<vmem>>, vector<4x256xbf16>
    tpu.vector_store %arg7[%c0_31, %c0_32], %24 {strides = array<i32>} : memref<128x256xbf16, #tpu.memory_space<vmem>>, vector<4x256xbf16>,
    %26 = vector.extract_strided_slice %19 {offsets = [0, 0, 1], sizes = [4, 16, 16], strides = [1, 1, 1]} : vector<4x18x18xf32> to vector<4x16x16xf32>
    %27 = vector.shape_cast %26 : vector<4x16x16xf32> to vector<4x256xf32>
    %28 = arith.truncf %27 : vector<4x256xf32> to vector<4x256xbf16>
    %c4 = arith.constant 4 : index
    %c0_33 = arith.constant 0 : index
    %29 = vector.load %arg7[%c4, %c0_33] : memref<128x256xbf16, #tpu.memory_space<vmem>>, vector<4x256xbf16>
    tpu.vector_store %arg7[%c4, %c0_33], %28 {strides = array<i32>} : memref<128x256xbf16, #tpu.memory_space<vmem>>, vector<4x256xbf16>,
    %30 = vector.extract_strided_slice %19 {offsets = [0, 0, 2], sizes = [4, 16, 16], strides = [1, 1, 1]} : vector<4x18x18xf32> to vector<4x16x16xf32>
    %31 = vector.shape_cast %30 : vector<4x16x16xf32> to vector<4x256xf32>
    %32 = arith.truncf %31 : vector<4x256xf32> to vector<4x256xbf16>
    %c8 = arith.constant 8 : index
    %c0_34 = arith.constant 0 : index
    %33 = vector.load %arg7[%c8, %c0_34] : memref<128x256xbf16, #tpu.memory_space<vmem>>, vector<4x256xbf16>
    tpu.vector_store %arg7[%c8, %c0_34], %32 {strides = array<i32>} : memref<128x256xbf16, #tpu.memory_space<vmem>>, vector<4x256xbf16>,
    %34 = vector.extract_strided_slice %19 {offsets = [0, 1, 0], sizes = [4, 16, 16], strides = [1, 1, 1]} : vector<4x18x18xf32> to vector<4x16x16xf32>
    %35 = vector.shape_cast %34 : vector<4x16x16xf32> to vector<4x256xf32>
    %36 = arith.truncf %35 : vector<4x256xf32> to vector<4x256xbf16>
    %c12 = arith.constant 12 : index
    %c0_35 = arith.constant 0 : index
    %37 = vector.load %arg7[%c12, %c0_35] : memref<128x256xbf16, #tpu.memory_space<vmem>>, vector<4x256xbf16>
    tpu.vector_store %arg7[%c12, %c0_35], %36 {strides = array<i32>} : memref<128x256xbf16, #tpu.memory_space<vmem>>, vector<4x256xbf16>,
    %38 = vector.extract_strided_slice %19 {offsets = [0, 1, 1], sizes = [4, 16, 16], strides = [1, 1, 1]} : vector<4x18x18xf32> to vector<4x16x16xf32>
    %39 = vector.shape_cast %38 : vector<4x16x16xf32> to vector<4x256xf32>
    %40 = arith.truncf %39 : vector<4x256xf32> to vector<4x256xbf16>
    %c16 = arith.constant 16 : index
    %c0_36 = arith.constant 0 : index
    %41 = vector.load %arg7[%c16, %c0_36] : memref<128x256xbf16, #tpu.memory_space<vmem>>, vector<4x256xbf16>
    tpu.vector_store %arg7[%c16, %c0_36], %40 {strides = array<i32>} : memref<128x256xbf16, #tpu.memory_space<vmem>>, vector<4x256xbf16>,
    %42 = vector.extract_strided_slice %19 {offsets = [0, 1, 2], sizes = [4, 16, 16], strides = [1, 1, 1]} : vector<4x18x18xf32> to vector<4x16x16xf32>
    %43 = vector.shape_cast %42 : vector<4x16x16xf32> to vector<4x256xf32>
    %44 = arith.truncf %43 : vector<4x256xf32> to vector<4x256xbf16>
    %c20 = arith.constant 20 : index
    %c0_37 = arith.constant 0 : index
    %45 = vector.load %arg7[%c20, %c0_37] : memref<128x256xbf16, #tpu.memory_space<vmem>>, vector<4x256xbf16>
    tpu.vector_store %arg7[%c20, %c0_37], %44 {strides = array<i32>} : memref<128x256xbf16, #tpu.memory_space<vmem>>, vector<4x256xbf16>,
    %46 = vector.extract_strided_slice %19 {offsets = [0, 2, 0], sizes = [4, 16, 16], strides = [1, 1, 1]} : vector<4x18x18xf32> to vector<4x16x16xf32>
    %47 = vector.shape_cast %46 : vector<4x16x16xf32> to vector<4x256xf32>
    %48 = arith.truncf %47 : vector<4x256xf32> to vector<4x256xbf16>
    %c24 = arith.constant 24 : index
    %c0_38 = arith.constant 0 : index
    %49 = vector.load %arg7[%c24, %c0_38] : memref<128x256xbf16, #tpu.memory_space<vmem>>, vector<4x256xbf16>
    tpu.vector_store %arg7[%c24, %c0_38], %48 {strides = array<i32>} : memref<128x256xbf16, #tpu.memory_space<vmem>>, vector<4x256xbf16>,
    %50 = vector.extract_strided_slice %19 {offsets = [0, 2, 1], sizes = [4, 16, 16], strides = [1, 1, 1]} : vector<4x18x18xf32> to vector<4x16x16xf32>
    %51 = vector.shape_cast %50 : vector<4x16x16xf32> to vector<4x256xf32>
    %52 = arith.truncf %51 : vector<4x256xf32> to vector<4x256xbf16>
    %c28 = arith.constant 28 : index
    %c0_39 = arith.constant 0 : index
    %53 = vector.load %arg7[%c28, %c0_39] : memref<128x256xbf16, #tpu.memory_space<vmem>>, vector<4x256xbf16>
    tpu.vector_store %arg7[%c28, %c0_39], %52 {strides = array<i32>} : memref<128x256xbf16, #tpu.memory_space<vmem>>, vector<4x256xbf16>,
    %54 = vector.extract_strided_slice %19 {offsets = [0, 2, 2], sizes = [4, 16, 16], strides = [1, 1, 1]} : vector<4x18x18xf32> to vector<4x16x16xf32>
    %55 = vector.shape_cast %54 : vector<4x16x16xf32> to vector<4x256xf32>
    %56 = arith.truncf %55 : vector<4x256xf32> to vector<4x256xbf16>
    %c32 = arith.constant 32 : index
    %c0_40 = arith.constant 0 : index
    %57 = vector.load %arg7[%c32, %c0_40] : memref<128x256xbf16, #tpu.memory_space<vmem>>, vector<4x256xbf16>
    tpu.vector_store %arg7[%c32, %c0_40], %56 {strides = array<i32>} : memref<128x256xbf16, #tpu.memory_space<vmem>>, vector<4x256xbf16>,
    %c0_41 = arith.constant 0 : index
    %c0_42 = arith.constant 0 : index
    %58 = vector.load %arg4[%c0_41, %c0_42] : memref<8x128xbf16, #tpu.memory_space<vmem>>, vector<8x128xbf16>
    %c0_43 = arith.constant 0 : index
    %c0_44 = arith.constant 0 : index
    %59 = vector.load %arg7[%c0_43, %c0_44] : memref<128x256xbf16, #tpu.memory_space<vmem>>, vector<128x256xbf16>
    %cst_45 = arith.constant dense<0.000000e+00> : vector<8x256xf32>
    %60 = tpu.matmul %58, %59, %cst_45 {dimension_numbers = #tpu.dot_dimension_numbers<[1], [0], [0], [1], [0, 0, 1, 1], [], []>} : vector<8x128xbf16>, vector<128x256xbf16>, vector<8x256xf32> -> vector<8x256xf32>
    %c0_46 = arith.constant 0 : index
    %c0_47 = arith.constant 0 : index
    %c0_48 = arith.constant 0 : index
    %61 = vector.load %arg5[%c0_46, %c0_47, %c0_48] : memref<1x8x256xf32, #tpu.memory_space<vmem>>, vector<1x8x256xf32>
    %62 = vector.shape_cast %61 : vector<1x8x256xf32> to vector<8x256xf32>
    %63 = vector.shape_cast %60 : vector<8x256xf32> to vector<1x8x256xf32>
    tpu.vector_store %arg5[%c0_46, %c0_47, %c0_48], %63 {strides = array<i32>} : memref<1x8x256xf32, #tpu.memory_space<vmem>>, vector<1x8x256xf32>,
    return
  }
  func.func @transform_0(%arg0: i32) -> (i32, i32, i32, i32) {
    %c0_i32 = arith.constant 0 : i32
    %c0_i32_0 = arith.constant 0 : i32
    %c0_i32_1 = arith.constant 0 : i32
    %c0_i32_2 = arith.constant 0 : i32
    return %arg0, %c0_i32, %c0_i32_0, %c0_i32_1 : i32, i32, i32, i32
  }
  func.func @transform_1(%arg0: i32) -> (i32, i32, i32) {
    %c0_i32 = arith.constant 0 : i32
    %c0_i32_0 = arith.constant 0 : i32
    %c0_i32_1 = arith.constant 0 : i32
    %c0_i32_2 = arith.constant 0 : i32
    return %c0_i32, %c0_i32_0, %c0_i32_1 : i32, i32, i32
  }
  func.func @transform_2(%arg0: i32) -> (i32, i32, i32) {
    %c0_i32 = arith.constant 0 : i32
    %c0_i32_0 = arith.constant 0 : i32
    %c0_i32_1 = arith.constant 0 : i32
    %c0_i32_2 = arith.constant 0 : i32
    return %c0_i32, %c0_i32_0, %c0_i32_1 : i32, i32, i32
  }
  func.func @transform_3(%arg0: i32) -> (i32, i32) {
    %c0_i32 = arith.constant 0 : i32
    %c0_i32_0 = arith.constant 0 : i32
    %c0_i32_1 = arith.constant 0 : i32
    return %c0_i32, %c0_i32_0 : i32, i32
  }
  func.func @transform_4(%arg0: i32) -> (i32, i32, i32) {
    %c0_i32 = arith.constant 0 : i32
    %c0_i32_0 = arith.constant 0 : i32
    %c0_i32_1 = arith.constant 0 : i32
    return %arg0, %c0_i32, %c0_i32_0 : i32, i32, i32
  }
}

</mosaic_0001>

<llo_original>
// kernel: tpu_custom_call.1
$region0: #{tpu_custom_call.1}
  #allocation0 [shape = 'u32[]', space=smem, size = 0x4, offset = 0x4, fixed_abs, tag = 'smem constant byte address 0x4 - core index']
  #allocation1 [shape = 'u32[144,128]{1,0:T(1,128)}', space=vmem, size = 0x12000, scoped, tag = 'internal scratch']
  #allocation2 [shape = 'f32[4,18,18]{2,1,0:T(8,128)}', space=vmem, size = 0xc000, scoped, tag = 'scratch operand']
  #allocation3 [shape = 'bf16[128,256]{1,0:T(8,128)(2,1)}', space=vmem, size = 0x10000, scoped, tag = 'scratch operand']
  %s0 = inlined_call_operand.hbm [shape: f32[2,4,16,16], index: 0, kind: input, shape index: {}]
  %s1 = inlined_call_operand.vmem [shape: f32[4,1,1], index: 1, kind: input, shape index: {}]
  %s2 = inlined_call_operand.vmem [shape: f32[4,1,1], index: 2, kind: input, shape index: {}]
  %s3 = inlined_call_operand.vmem [shape: bf16[8,128], index: 3, kind: input, shape index: {}]
  %s4 = inlined_call_operand.hbm [shape: f32[2,8,256], index: 4, kind: output, shape index: {}]
  %s5 = sld [smem:[#allocation0]]
  $region53: #{tpu_custom_call.1} parent=0
    _
  %s7 = ssub.s32 1, %s5
  %s8 = scalar_select 0, %s7, %s5
  $region1: #{tpu_custom_call.1} parent=0
    #allocation4 [shape = 'u8[65536]{0}', space=vmem, size = 0x10000, scoped, tag = 'input window, operand 0']
    #allocation5 [shape = 's32[2]{0}', space=sflag, size = 0x8, scoped, tag = 'scoped memory for tpu_custom_call.1']
    #allocation6 [shape = 's32[2]{0}', space=sflag, size = 0x8, scoped, tag = 'scoped memory for tpu_custom_call.1']
    #allocation7 [shape = 'u8[16384]{0}', space=vmem, size = 0x4000, scoped, tag = 'output window, operand 0']
    %9 = vsyncpa [#allocation5], 0
    %s10 = scalar_lea.sflag [#allocation5], 1
    %11 = vsyncpa %s10, 0
    %12 = vsyncpa [#allocation6], 0
    %s13 = scalar_lea.sflag [#allocation6], 1
    %14 = vsyncpa %s13, 0
    loop: start=0, step=1, limit=4
    $region2: #{tpu_custom_call.1} parent=1 // loop_pre_header
      _
    $region3: #{tpu_custom_call.1} parent=1 // loop_header
      %s16 = sphi 0, %s20
      %p17 = scmp.ge.s32.totalorder %s16, 4
      %s26 = sphi 0, %s28
      %s29 = sphi 0, %s26
      %s30 = sphi 0, %s29
      %s46 = sphi 0, %s30
      %s50 = sphi 0, %s50
      %s52 = sphi 0, %s50
      %s53 = sphi 0, %s52
      %s67 = sphi 0, %s53
      %s71 = sphi 0, %s71
      %s73 = sphi 0, %s71
      %s74 = sphi 0, %s73
      %s88 = sphi 0, %s74
      %s92 = sphi 0, %s92
      %s94 = sphi 0, %s92
      %s95 = sphi 0, %s94
      %s109 = sphi 0, %s95
      %s115 = sphi 0, %s117
      %s118 = sphi 0, %s115
      %s119 = sphi 0, %s118
      %s135 = sphi 0, %s119
    $region4: #{tpu_custom_call.1} parent=1 // loop_header_branch
      %19 = sbr.rel (%p17) target = $region8
    $region5: #{tpu_custom_call.1} parent=1 // loop_body
      %s21 = ssub.s32 %s16, 1
      %s22 = ssub.s32 %s16, 2
      %s23 = sadd.s32 %s16, 1
      %s24 = ssub.s32 %s16, %s23
      %p25 = scmp.eq.s32.totalorder %s24, 0
      %s27 = sadd.s32 %s26, 1
      %s28 = scalar_select %p25, %s26, %s27
      %p31 = pneg %p25
      %p32 = scmp.eq.s32.totalorder %s16, 1
      %p33 = por %p31, %p32
      %p34 = scmp.ne.s32.totalorder %s26, %s29
      %p35 = scmp.eq.s32.totalorder %s16, 0
      %p36 = por %p34, %p35
      %p37 = scmp.ne.s32.totalorder %s26, %s29
      %p38 = scmp.eq.s32.totalorder %s21, 1
      %p39 = por %p37, %p38
      %p40 = scmp.ne.s32.totalorder %s29, %s30
      %p41 = scmp.eq.s32.totalorder %s21, 0
      %p42 = por %p40, %p41
      %p43 = scmp.ne.s32.totalorder %s29, %s30
      %p44 = scmp.eq.s32.totalorder %s22, 1
      %p45 = por %p43, %p44
      %p47 = scmp.ne.s32.totalorder %s30, %s46
      %p48 = scmp.eq.s32.totalorder %s22, 0
      %p49 = por %p47, %p48
      %s51 = sadd.s32 %s50, 1
      %p54 = scmp.eq.s32.totalorder %s16, 1
      %p55 = scmp.ne.s32.totalorder %s50, %s52
      %p56 = scmp.eq.s32.totalorder %s16, 0
      %p57 = por %p55, %p56
      %p58 = scmp.ne.s32.totalorder %s50, %s52
      %p59 = scmp.eq.s32.totalorder %s21, 1
      %p60 = por %p58, %p59
      %p61 = scmp.ne.s32.totalorder %s52, %s53
      %p62 = scmp.eq.s32.totalorder %s21, 0
      %p63 = por %p61, %p62
      %p64 = scmp.ne.s32.totalorder %s52, %s53
      %p65 = scmp.eq.s32.totalorder %s22, 1
      %p66 = por %p64, %p65
      %p68 = scmp.ne.s32.totalorder %s53, %s67
      %p69 = scmp.eq.s32.totalorder %s22, 0
      %p70 = por %p68, %p69
      %s72 = sadd.s32 %s71, 1
      %p75 = scmp.eq.s32.totalorder %s16, 1
      %p76 = scmp.ne.s32.totalorder %s71, %s73
      %p77 = scmp.eq.s32.totalorder %s16, 0
      %p78 = por %p76, %p77
      %p79 = scmp.ne.s32.totalorder %s71, %s73
      %p80 = scmp.eq.s32.totalorder %s21, 1
      %p81 = por %p79, %p80
      %p82 = scmp.ne.s32.totalorder %s73, %s74
      %p83 = scmp.eq.s32.totalorder %s21, 0
      %p84 = por %p82, %p83
      %p85 = scmp.ne.s32.totalorder %s73, %s74
      %p86 = scmp.eq.s32.totalorder %s22, 1
      %p87 = por %p85, %p86
      %p89 = scmp.ne.s32.totalorder %s74, %s88
      %p90 = scmp.eq.s32.totalorder %s22, 0
      %p91 = por %p89, %p90
      %s93 = sadd.s32 %s92, 1
      %p96 = scmp.eq.s32.totalorder %s16, 1
      %p97 = scmp.ne.s32.totalorder %s92, %s94
      %p98 = scmp.eq.s32.totalorder %s16, 0
      %p99 = por %p97, %p98
      %p100 = scmp.ne.s32.totalorder %s92, %s94
      %p101 = scmp.eq.s32.totalorder %s21, 1
      %p102 = por %p100, %p101
      %p103 = scmp.ne.s32.totalorder %s94, %s95
      %p104 = scmp.eq.s32.totalorder %s21, 0
      %p105 = por %p103, %p104
      %p106 = scmp.ne.s32.totalorder %s94, %s95
      %p107 = scmp.eq.s32.totalorder %s22, 1
      %p108 = por %p106, %p107
      %p110 = scmp.ne.s32.totalorder %s95, %s109
      %p111 = scmp.eq.s32.totalorder %s22, 0
      %p112 = por %p110, %p111
      %s113 = ssub.s32 %s16, %s23
      %p114 = scmp.eq.s32.totalorder %s113, 0
      %s116 = sadd.s32 %s115, 1
      %s117 = scalar_select %p114, %s115, %s116
      %p120 = pneg %p114
      %p121 = scmp.eq.s32.totalorder %s16, 1
      %p122 = por %p120, %p121
      %p123 = scmp.ne.s32.totalorder %s115, %s118
      %p124 = scmp.eq.s32.totalorder %s16, 0
      %p125 = por %p123, %p124
      %p126 = scmp.ne.s32.totalorder %s115, %s118
      %p127 = scmp.eq.s32.totalorder %s21, 1
      %p128 = por %p126, %p127
      %p129 = scmp.ne.s32.totalorder %s118, %s119
      %p130 = scmp.eq.s32.totalorder %s21, 0
      %p131 = por %p129, %p130
      %p132 = scmp.ne.s32.totalorder %s118, %s119
      %p133 = scmp.eq.s32.totalorder %s22, 1
      %p134 = por %p132, %p133
      %p136 = scmp.ne.s32.totalorder %s119, %s135
      %p137 = scmp.eq.s32.totalorder %s22, 0
      %p138 = por %p136, %p137
      %p139 = scmp.le.s32.totalorder 1, %s16
      %p140 = scmp.lt.s32.totalorder %s16, 3
      %p141 = pnand %p139, %p140
      %p142 = pneg %p141
      // Predicated region
      $region9: #{tpu_custom_call.1} parent=5 // pred_check
        _
      $region10: #{tpu_custom_call.1} parent=5 // pred_check_branch
        %144 = sbr.rel (%p141) target = $region12
      $region11: #{tpu_custom_call.1} parent=5 // pred_region
        %s145 = ssub.s32 %s16, 1
        // Predicated region
        $region13: #{tpu_custom_call.1} parent=11 // pred_check
          %p146 = pneg %p63
        $region14: #{tpu_custom_call.1} parent=11 // pred_check_branch
          %148 = sbr.rel (%p146) target = $region16
        $region15: #{tpu_custom_call.1} parent=11 // pred_region
          _
        $region16: #{tpu_custom_call.1} parent=11 // pred_fallthru
          _
        // Predicated region
        $region17: #{tpu_custom_call.1} parent=11 // pred_check
          %p149 = pneg %p84
        $region18: #{tpu_custom_call.1} parent=11 // pred_check_branch
          %151 = sbr.rel (%p149) target = $region20
        $region19: #{tpu_custom_call.1} parent=11 // pred_region
          _
        $region20: #{tpu_custom_call.1} parent=11 // pred_fallthru
          _
        // Predicated region
        $region21: #{tpu_custom_call.1} parent=11 // pred_check
          %p152 = pneg %p105
        $region22: #{tpu_custom_call.1} parent=11 // pred_check_branch
          %154 = sbr.rel (%p152) target = $region24
        $region23: #{tpu_custom_call.1} parent=11 // pred_region
          _
        $region24: #{tpu_custom_call.1} parent=11 // pred_fallthru
          _
      $region12: #{tpu_custom_call.1} parent=5 // pred_fallthru
        _
      %p155 = scmp.lt.s32.totalorder %s16, 2
      // Predicated region
      $region25: #{tpu_custom_call.1} parent=5 // pred_check
        %p156 = pneg %p155
      $region26: #{tpu_custom_call.1} parent=5 // pred_check_branch
        %158 = sbr.rel (%p156) target = $region28
      $region27: #{tpu_custom_call.1} parent=5 // pred_region
        // Predicated region
        $region29: #{tpu_custom_call.1} parent=27 // pred_check
          %p159 = pneg %p36
        $region30: #{tpu_custom_call.1} parent=27 // pred_check_branch
          %161 = sbr.rel (%p159) target = $region32
        $region31: #{tpu_custom_call.1} parent=27 // pred_region
          %s162 = sand.u32 %s26, 1
          %s163 = scalar_lea.sflag [#allocation5], %s162
          %s164 = sand.u32 %s26, 1
          %s165 = smul.addr %s164, 64
          %s166 = scalar_lea.vmem [#allocation4], %s165
          %s168 = ssub.s32 1024, 1024
          %169 = vsyncadd %s163, %s168
          %s170 = smul.addr %s16, 8
          %s171 = smul.addr %s170, 128
          %s172 = scalar_lea.hbm %s0, %s171
          %s173 = sshll.u32 %s166, 4
          %s174 = int_to_ptr.vmem [resolvable:$true] %s173
          %179 = dma.hbm_to_vmem [thread:$0]  %s172, 1024, %s174, %s163, 128, 128, 8
        $region32: #{tpu_custom_call.1} parent=27 // pred_fallthru
          _
      $region28: #{tpu_custom_call.1} parent=5 // pred_fallthru
        _
      %p180 = scmp.le.s32.totalorder 1, %s16
      %p181 = scmp.lt.s32.totalorder %s16, 3
      %p182 = pnand %p180, %p181
      %p183 = pneg %p182
      // Predicated region
      $region33: #{tpu_custom_call.1} parent=5 // pred_check
        _
      $region34: #{tpu_custom_call.1} parent=5 // pred_check_branch
        %185 = sbr.rel (%p182) target = $region36
      $region35: #{tpu_custom_call.1} parent=5 // pred_region
        %s186 = ssub.s32 %s16, 1
        %s187 = sand.u32 %s29, 1
        %s188 = scalar_lea.sflag [#allocation5], %s187
        %s189 = sand.u32 %s29, 1
        %s190 = smul.addr %s189, 64
        %s191 = scalar_lea.vmem [#allocation4], %s190
        // Predicated region
        $region37: #{tpu_custom_call.1} parent=35 // pred_check
          %p192 = pneg %p42
        $region38: #{tpu_custom_call.1} parent=35 // pred_check_branch
          %194 = sbr.rel (%p192) target = $region40
        $region39: #{tpu_custom_call.1} parent=35 // pred_region
          %195 = dma.done %s188, 1024
        $region40: #{tpu_custom_call.1} parent=35 // pred_fallthru
          _
        %s196 = sand.u32 %s29, 1
        %s197 = scalar_lea.sflag [#allocation5], %s196
        %s198 = sand.u32 %s29, 1
        %s199 = smul.addr %s198, 64
        %s200 = scalar_lea.vmem [#allocation4], %s199
        %p201 = pneg %p42
        %p202 = pneg %p39
        %p203 = pneg %p63
        %p204 = pneg %p60
        %p205 = pneg %p84
        %p206 = pneg %p81
        %p207 = pneg %p105
        %p208 = pneg %p102
        %p209 = pneg %p131
        %p210 = pneg %p128
        %s211 = sand.u32 %s118, 1
        %s212 = scalar_lea.sflag [#allocation6], %s211
        %s213 = sand.u32 %s118, 1
        %s214 = smul.addr %s213, 16
        %s215 = scalar_lea.vmem [#allocation7], %s214
        %v217 = vld [vmem:[%s191] sm:$0xff]
        %v218 = vld [vmem:[%s191 + $0x8] sm:$0xff]
        %v219 = vld [vmem:[%s191 + $0x10] sm:$0xff]
        %v220 = vld [vmem:[%s191 + $0x18] sm:$0xff]
        %v221 = vld [vmem:[%s191 + $0x20] sm:$0xff]
        %v222 = vld [vmem:[%s191 + $0x28] sm:$0xff]
        %v223 = vld [vmem:[%s191 + $0x30] sm:$0xff]
        %v224 = vld [vmem:[%s191 + $0x38] sm:$0xff]
        %v225 = vld [vmem:[%s1] sm:$0x1]
        %v226 = vld [vmem:[%s1 + $0x1] sm:$0x1]
        %v227 = vld [vmem:[%s1 + $0x2] sm:$0x1]
        %v228 = vld [vmem:[%s1 + $0x3] sm:$0x1]
        %v233 = vlaneseq
        %v234 = vshrl.u32 %v233, 7
        %v235 = vsub.s32 0, %v234
        %v236 = vrot.slane %v225, %v235
        %v237 = vlaneseq
        %v238 = vshrl.u32 %v237, 7
        %v239 = vsub.s32 0, %v238
        %v240 = vrot.slane %v226, %v239
        %v241 = vlaneseq
        %v242 = vshrl.u32 %v241, 7
        %v243 = vsub.s32 0, %v242
        %v244 = vrot.slane %v227, %v243
        %v245 = vlaneseq
        %v246 = vshrl.u32 %v245, 7
        %v247 = vsub.s32 0, %v246
        %v248 = vrot.slane %v228, %v247
        %249 = vset.pattern.permute.xlu0 0
        %250 = vperm.xlu0 %249, %v236
        %v251 = vpop.permute.xlu0 %250
        %253 = vset.pattern.permute.xlu0 0
        %254 = vperm.xlu0 %253, %v240
        %v255 = vpop.permute.xlu0 %254
        %257 = vset.pattern.permute.xlu0 0
        %258 = vperm.xlu0 %257, %v244
        %v259 = vpop.permute.xlu0 %258
        %261 = vset.pattern.permute.xlu0 0
        %262 = vperm.xlu0 %261, %v248
        %v263 = vpop.permute.xlu0 %262
        %v265 = vmul.f32 %v217, %v251
        %v266 = vmul.f32 %v218, %v251
        %v267 = vmul.f32 %v219, %v255
        %v268 = vmul.f32 %v220, %v255
        %v269 = vmul.f32 %v221, %v259
        %v270 = vmul.f32 %v222, %v259
        %v271 = vmul.f32 %v223, %v263
        %v272 = vmul.f32 %v224, %v263
        %v273 = vld [vmem:[%s2] sm:$0x1]
        %v274 = vld [vmem:[%s2 + $0x1] sm:$0x1]
        %v275 = vld [vmem:[%s2 + $0x2] sm:$0x1]
        %v276 = vld [vmem:[%s2 + $0x3] sm:$0x1]
        %v281 = vlaneseq
        %v282 = vshrl.u32 %v281, 7
        %v283 = vsub.s32 0, %v282
        %v284 = vrot.slane %v273, %v283
        %v285 = vlaneseq
        %v286 = vshrl.u32 %v285, 7
        %v287 = vsub.s32 0, %v286
        %v288 = vrot.slane %v274, %v287
        %v289 = vlaneseq
        %v290 = vshrl.u32 %v289, 7
        %v291 = vsub.s32 0, %v290
        %v292 = vrot.slane %v275, %v291
        %v293 = vlaneseq
        %v294 = vshrl.u32 %v293, 7
        %v295 = vsub.s32 0, %v294
        %v296 = vrot.slane %v276, %v295
        %297 = vset.pattern.permute.xlu0 0
        %298 = vperm.xlu0 %297, %v284
        %v299 = vpop.permute.xlu0 %298
        %301 = vset.pattern.permute.xlu0 0
        %302 = vperm.xlu0 %301, %v288
        %v303 = vpop.permute.xlu0 %302
        %305 = vset.pattern.permute.xlu0 0
        %306 = vperm.xlu0 %305, %v292
        %v307 = vpop.permute.xlu0 %306
        %309 = vset.pattern.permute.xlu0 0
        %310 = vperm.xlu0 %309, %v296
        %v311 = vpop.permute.xlu0 %310
        %v313 = vadd.f32 %v265, %v299
        %v314 = vadd.f32 %v266, %v299
        %v315 = vadd.f32 %v267, %v303
        %v316 = vadd.f32 %v268, %v303
        %v317 = vadd.f32 %v269, %v307
        %v318 = vadd.f32 %v270, %v307
        %v319 = vadd.f32 %v271, %v311
        %v320 = vadd.f32 %v272, %v311
        %v321 = vmax.f32 %v313, 0.0
        %v322 = vmax.f32 %v314, 0.0
        %v323 = vmax.f32 %v315, 0.0
        %v324 = vmax.f32 %v316, 0.0
        %v325 = vmax.f32 %v317, 0.0
        %v326 = vmax.f32 %v318, 0.0
        %v327 = vmax.f32 %v319, 0.0
        %v328 = vmax.f32 %v320, 0.0
        %vm329 = vcmask 139264
        %330 = vst.msk [vmem:[#allocation2] sm:$0x1] %vm329, 0.0
        %331 = vst.msk [vmem:[#allocation2 + $0x18] sm:$0x1] %vm329, 0.0
        %332 = vst.msk [vmem:[#allocation2 + $0x30] sm:$0x1] %vm329, 0.0
        %333 = vst.msk [vmem:[#allocation2 + $0x48] sm:$0x1] %vm329, 0.0
        %334 = vst.msk [vmem:[#allocation2 + $0x11] sm:$0x1] %vm329, 0.0
        %335 = vst.msk [vmem:[#allocation2 + $0x29] sm:$0x1] %vm329, 0.0
        %336 = vst.msk [vmem:[#allocation2 + $0x41] sm:$0x1] %vm329, 0.0
        %337 = vst.msk [vmem:[#allocation2 + $0x59] sm:$0x1] %vm329, 0.0
        %vm338 = vcmask 7168
        %339 = vst.msk [vmem:[#allocation2 + $0x1] sm:$0xff] %vm338, 0.0
        %340 = vst.msk [vmem:[#allocation2 + $0x9] sm:$0xff] %vm338, 0.0
        %341 = vst.msk [vmem:[#allocation2 + $0x19] sm:$0xff] %vm338, 0.0
        %342 = vst.msk [vmem:[#allocation2 + $0x21] sm:$0xff] %vm338, 0.0
        %343 = vst.msk [vmem:[#allocation2 + $0x31] sm:$0xff] %vm338, 0.0
        %344 = vst.msk [vmem:[#allocation2 + $0x39] sm:$0xff] %vm338, 0.0
        %345 = vst.msk [vmem:[#allocation2 + $0x49] sm:$0xff] %vm338, 0.0
        %346 = vst.msk [vmem:[#allocation2 + $0x51] sm:$0xff] %vm338, 0.0
        %vm347 = vcmask 146568
        %348 = vst.msk [vmem:[#allocation2 + $0x1] sm:$0xff] %vm347, 0.0
        %349 = vst.msk [vmem:[#allocation2 + $0x9] sm:$0xff] %vm347, 0.0
        %350 = vst.msk [vmem:[#allocation2 + $0x19] sm:$0xff] %vm347, 0.0
        %351 = vst.msk [vmem:[#allocation2 + $0x21] sm:$0xff] %vm347, 0.0
        %352 = vst.msk [vmem:[#allocation2 + $0x31] sm:$0xff] %vm347, 0.0
        %353 = vst.msk [vmem:[#allocation2 + $0x39] sm:$0xff] %vm347, 0.0
        %354 = vst.msk [vmem:[#allocation2 + $0x49] sm:$0xff] %vm347, 0.0
        %355 = vst.msk [vmem:[#allocation2 + $0x51] sm:$0xff] %vm347, 0.0
        %364 = vrot.lane.b32.xlu0 %v321, 1
        %v365 = vpop.permute.xlu0 %364
        %366 = vrot.lane.b32.xlu0 %v322, 1
        %v367 = vpop.permute.xlu0 %366
        %368 = vrot.lane.b32.xlu0 %v323, 1
        %v369 = vpop.permute.xlu0 %368
        %370 = vrot.lane.b32.xlu0 %v324, 1
        %v371 = vpop.permute.xlu0 %370
        %372 = vrot.lane.b32.xlu0 %v325, 1
        %v373 = vpop.permute.xlu0 %372
        %374 = vrot.lane.b32.xlu0 %v326, 1
        %v375 = vpop.permute.xlu0 %374
        %376 = vrot.lane.b32.xlu0 %v327, 1
        %v377 = vpop.permute.xlu0 %376
        %378 = vrot.lane.b32.xlu0 %v328, 1
        %v379 = vpop.permute.xlu0 %378
        %vm388 = vcmask 138248
        %389 = vst.msk [vmem:[#allocation2 + $0x1] sm:$0xff] %vm388, %v365
        %390 = vst.msk [vmem:[#allocation2 + $0x9] sm:$0xff] %vm388, %v367
        %391 = vst.msk [vmem:[#allocation2 + $0x19] sm:$0xff] %vm388, %v369
        %392 = vst.msk [vmem:[#allocation2 + $0x21] sm:$0xff] %vm388, %v371
        %393 = vst.msk [vmem:[#allocation2 + $0x31] sm:$0xff] %vm388, %v373
        %394 = vst.msk [vmem:[#allocation2 + $0x39] sm:$0xff] %vm388, %v375
        %395 = vst.msk [vmem:[#allocation2 + $0x49] sm:$0xff] %vm388, %v377
        %396 = vst.msk [vmem:[#allocation2 + $0x51] sm:$0xff] %vm388, %v379
        %v397 = vld [vmem:[#allocation2] sm:$0xff]
        %v398 = vld [vmem:[#allocation2 + $0x8] sm:$0xff]
        %v399 = vld [vmem:[#allocation2 + $0x10] sm:$0x3]
        %v400 = vld [vmem:[#allocation2 + $0x18] sm:$0xff]
        %v401 = vld [vmem:[#allocation2 + $0x20] sm:$0xff]
        %v402 = vld [vmem:[#allocation2 + $0x28] sm:$0x3]
        %v403 = vld [vmem:[#allocation2 + $0x30] sm:$0xff]
        %v404 = vld [vmem:[#allocation2 + $0x38] sm:$0xff]
        %v405 = vld [vmem:[#allocation2 + $0x40] sm:$0x3]
        %v406 = vld [vmem:[#allocation2 + $0x48] sm:$0xff]
        %v407 = vld [vmem:[#allocation2 + $0x50] sm:$0xff]
        %v408 = vld [vmem:[#allocation2 + $0x58] sm:$0x3]
        %409 = vst [vmem:[#allocation3 + $0x20] sm:$0xcc] 0
        %410 = vst [vmem:[#allocation3 + $0x28] sm:$0xff] 0
        %411 = vst [vmem:[#allocation3 + $0x30] sm:$0xff] 0
        %412 = vst [vmem:[#allocation3 + $0x38] sm:$0xff] 0
        %413 = vst [vmem:[#allocation3 + $0x40] sm:$0xff] 0
        %414 = vst [vmem:[#allocation3 + $0x48] sm:$0xff] 0
        %415 = vst [vmem:[#allocation3 + $0x50] sm:$0xff] 0
        %416 = vst [vmem:[#allocation3 + $0x58] sm:$0xff] 0
        %417 = vst [vmem:[#allocation3 + $0x60] sm:$0xff] 0
        %418 = vst [vmem:[#allocation3 + $0x68] sm:$0xff] 0
        %419 = vst [vmem:[#allocation3 + $0x70] sm:$0xff] 0
        %420 = vst [vmem:[#allocation3 + $0x78] sm:$0xff] 0
        %v421 = vcombine.low %v397, %v403
        %v422 = vcombine.high %v397, %v403
        %v424 = vunpack.c.l.s4 1983009808
        %v425 = vunpack.c.0.s8 %v424
        %v426 = vlaneseq
        %v427 = vshrl.u32 %v426, 7
        %v428 = vsub.s32 %v425, %v427
        %v429 = vrot.slane %v421, %v428
        %v431 = vunpack.c.l.s4 1983009808
        %v432 = vunpack.c.0.s8 %v431
        %v433 = vlaneseq
        %v434 = vshrl.u32 %v433, 7
        %v435 = vsub.s32 %v432, %v434
        %v436 = vrot.slane %v422, %v435
        %v437 = vcombine.low %v400, %v406
        %v438 = vcombine.high %v400, %v406
        %v440 = vunpack.c.l.s4 1983009808
        %v441 = vunpack.c.0.s8 %v440
        %v442 = vlaneseq
        %v443 = vshrl.u32 %v442, 7
        %v444 = vsub.s32 %v441, %v443
        %v445 = vrot.slane %v437, %v444
        %v447 = vunpack.c.l.s4 1983009808
        %v448 = vunpack.c.0.s8 %v447
        %v449 = vlaneseq
        %v450 = vshrl.u32 %v449, 7
        %v451 = vsub.s32 %v448, %v450
        %v452 = vrot.slane %v438, %v451
        %v453 = vcombine.low %v429, %v445
        %v454 = vcombine.high %v429, %v445
        %v456 = vunpack.c.l.s4 1934713408
        %v457 = vunpack.c.0.s8 %v456
        %v458 = vlaneseq
        %v459 = vshrl.u32 %v458, 7
        %v460 = vsub.s32 %v457, %v459
        %v461 = vrot.slane %v453, %v460
        %v463 = vunpack.c.l.s4 1934713408
        %v464 = vunpack.c.0.s8 %v463
        %v465 = vlaneseq
        %v466 = vshrl.u32 %v465, 7
        %v467 = vsub.s32 %v464, %v466
        %v468 = vrot.slane %v454, %v467
        %v469 = vcombine.low %v436, %v452
        %v470 = vcombine.high %v436, %v452
        %v472 = vunpack.c.l.s4 1934713408
        %v473 = vunpack.c.0.s8 %v472
        %v474 = vlaneseq
        %v475 = vshrl.u32 %v474, 7
        %v476 = vsub.s32 %v473, %v475
        %v477 = vrot.slane %v469, %v476
        %v479 = vunpack.c.l.s4 1934713408
        %v480 = vunpack.c.0.s8 %v479
        %v481 = vlaneseq
        %v482 = vshrl.u32 %v481, 7
        %v483 = vsub.s32 %v480, %v482
        %v484 = vrot.slane %v470, %v483
        %v485 = vcombine.high %v461, 0.0
        %v486 = vcombine.high %v468, 0.0
        %v487 = vcombine.high %v477, 0.0
        %v488 = vcombine.high %v484, 0.0
        %v489 = vcombine.low %v398, %v404
        %v490 = vcombine.high %v398, %v404
        %v492 = vunpack.c.l.s4 1983009808
        %v493 = vunpack.c.0.s8 %v492
        %v494 = vlaneseq
        %v495 = vshrl.u32 %v494, 7
        %v496 = vsub.s32 %v493, %v495
        %v497 = vrot.slane %v489, %v496
        %v499 = vunpack.c.l.s4 1983009808
        %v500 = vunpack.c.0.s8 %v499
        %v501 = vlaneseq
        %v502 = vshrl.u32 %v501, 7
        %v503 = vsub.s32 %v500, %v502
        %v504 = vrot.slane %v490, %v503
        %v505 = vcombine.low %v401, %v407
        %v506 = vcombine.high %v401, %v407
        %v508 = vunpack.c.l.s4 1983009808
        %v509 = vunpack.c.0.s8 %v508
        %v510 = vlaneseq
        %v511 = vshrl.u32 %v510, 7
        %v512 = vsub.s32 %v509, %v511
        %v513 = vrot.slane %v505, %v512
        %v515 = vunpack.c.l.s4 1983009808
        %v516 = vunpack.c.0.s8 %v515
        %v517 = vlaneseq
        %v518 = vshrl.u32 %v517, 7
        %v519 = vsub.s32 %v516, %v518
        %v520 = vrot.slane %v506, %v519
        %v521 = vcombine.low %v497, %v513
        %v522 = vcombine.high %v497, %v513
        %v524 = vunpack.c.l.s4 1934713408
        %v525 = vunpack.c.0.s8 %v524
        %v526 = vlaneseq
        %v527 = vshrl.u32 %v526, 7
        %v528 = vsub.s32 %v525, %v527
        %v529 = vrot.slane %v521, %v528
        %v531 = vunpack.c.l.s4 1934713408
        %v532 = vunpack.c.0.s8 %v531
        %v533 = vlaneseq
        %v534 = vshrl.u32 %v533, 7
        %v535 = vsub.s32 %v532, %v534
        %v536 = vrot.slane %v522, %v535
        %v537 = vcombine.low %v504, %v520
        %v538 = vcombine.high %v504, %v520
        %v540 = vunpack.c.l.s4 1934713408
        %v541 = vunpack.c.0.s8 %v540
        %v542 = vlaneseq
        %v543 = vshrl.u32 %v542, 7
        %v544 = vsub.s32 %v541, %v543
        %v545 = vrot.slane %v537, %v544
        %v547 = vunpack.c.l.s4 1934713408
        %v548 = vunpack.c.0.s8 %v547
        %v549 = vlaneseq
        %v550 = vshrl.u32 %v549, 7
        %v551 = vsub.s32 %v548, %v550
        %v552 = vrot.slane %v538, %v551
        %v553 = vcombine.high %v529, 0.0
        %v554 = vcombine.high %v536, 0.0
        %v555 = vcombine.high %v545, 0.0
        %v556 = vcombine.high %v552, 0.0
        %558 = vrot.lane.b32.xlu0 %v485, 16
        %v559 = vpop.permute.xlu0 %558
        %562 = vrot.lane.b32.xlu0 %v468, 32
        %v563 = vpop.permute.xlu0 %562
        %566 = vrot.lane.b32.xlu0 %v486, 48
        %v567 = vpop.permute.xlu0 %566
        %570 = vrot.lane.b32.xlu0 %v477, 64
        %v571 = vpop.permute.xlu0 %570
        %574 = vrot.lane.b32.xlu0 %v487, 80
        %v575 = vpop.permute.xlu0 %574
        %578 = vrot.lane.b32.xlu0 %v484, 96
        %v579 = vpop.permute.xlu0 %578
        %582 = vrot.lane.b32.xlu0 %v488, 112
        %v583 = vpop.permute.xlu0 %582
        %586 = vrot.lane.b32.xlu0 %v553, 16
        %v587 = vpop.permute.xlu0 %586
        %590 = vrot.lane.b32.xlu0 %v536, 32
        %v591 = vpop.permute.xlu0 %590
        %594 = vrot.lane.b32.xlu0 %v554, 48
        %v595 = vpop.permute.xlu0 %594
        %598 = vrot.lane.b32.xlu0 %v545, 64
        %v599 = vpop.permute.xlu0 %598
        %602 = vrot.lane.b32.xlu0 %v555, 80
        %v603 = vpop.permute.xlu0 %602
        %606 = vrot.lane.b32.xlu0 %v552, 96
        %v607 = vpop.permute.xlu0 %606
        %610 = vrot.lane.b32.xlu0 %v556, 112
        %v611 = vpop.permute.xlu0 %610
        %vm613 = vcmask 130048
        %v614 = vsel %vm613, %v461, %v559
        %vm615 = vcmask 261120
        %v616 = vsel %vm615, %v614, %v563
        %vm617 = vcmask 392192
        %v618 = vsel %vm617, %v616, %v567
        %vm619 = vcmask 523264
        %v620 = vsel %vm619, %v618, %v571
        %vm621 = vcmask 654336
        %v622 = vsel %vm621, %v620, %v575
        %vm623 = vcmask 785408
        %v624 = vsel %vm623, %v622, %v579
        %vm625 = vcmask 916480
        %v626 = vsel %vm625, %v624, %v583
        %v627 = vsel %vm613, %v529, %v587
        %v628 = vsel %vm615, %v627, %v591
        %v629 = vsel %vm617, %v628, %v595
        %v630 = vsel %vm619, %v629, %v599
        %v631 = vsel %vm621, %v630, %v603
        %v632 = vsel %vm623, %v631, %v607
        %v633 = vsel %vm625, %v632, %v611
        %v634 = vpack.c.bf16 %v626, %v626
        %v635 = vpack.c.bf16 %v633, %v633
        %v638 = vunpack.c.l.b16 %v634
        %v639 = vunpack.c.l.b16 %v635
        %v640 = vpack.c.b16 %v639, %v638
        %642 = vst [vmem:[#allocation3] sm:$0x33] %v640
        %651 = vrot.lane.b32.xlu0 %v397, 127
        %v652 = vpop.permute.xlu0 %651
        %653 = vrot.lane.b32.xlu0 %v398, 127
        %v654 = vpop.permute.xlu0 %653
        %655 = vrot.lane.b32.xlu0 %v400, 127
        %v656 = vpop.permute.xlu0 %655
        %657 = vrot.lane.b32.xlu0 %v401, 127
        %v658 = vpop.permute.xlu0 %657
        %659 = vrot.lane.b32.xlu0 %v403, 127
        %v660 = vpop.permute.xlu0 %659
        %661 = vrot.lane.b32.xlu0 %v404, 127
        %v662 = vpop.permute.xlu0 %661
        %663 = vrot.lane.b32.xlu0 %v406, 127
        %v664 = vpop.permute.xlu0 %663
        %665 = vrot.lane.b32.xlu0 %v407, 127
        %v666 = vpop.permute.xlu0 %665
        %v675 = vcombine.low %v652, %v660
        %v676 = vcombine.high %v652, %v660
        %v678 = vunpack.c.l.s4 1983009808
        %v679 = vunpack.c.0.s8 %v678
        %v680 = vlaneseq
        %v681 = vshrl.u32 %v680, 7
        %v682 = vsub.s32 %v679, %v681
        %v683 = vrot.slane %v675, %v682
        %v685 = vunpack.c.l.s4 1983009808
        %v686 = vunpack.c.0.s8 %v685
        %v687 = vlaneseq
        %v688 = vshrl.u32 %v687, 7
        %v689 = vsub.s32 %v686, %v688
        %v690 = vrot.slane %v676, %v689
        %v691 = vcombine.low %v656, %v664
        %v692 = vcombine.high %v656, %v664
        %v694 = vunpack.c.l.s4 1983009808
        %v695 = vunpack.c.0.s8 %v694
        %v696 = vlaneseq
        %v697 = vshrl.u32 %v696, 7
        %v698 = vsub.s32 %v695, %v697
        %v699 = vrot.slane %v691, %v698
        %v701 = vunpack.c.l.s4 1983009808
        %v702 = vunpack.c.0.s8 %v701
        %v703 = vlaneseq
        %v704 = vshrl.u32 %v703, 7
        %v705 = vsub.s32 %v702, %v704
        %v706 = vrot.slane %v692, %v705
        %v707 = vcombine.low %v683, %v699
        %v708 = vcombine.high %v683, %v699
        %v710 = vunpack.c.l.s4 1934713408
        %v711 = vunpack.c.0.s8 %v710
        %v712 = vlaneseq
        %v713 = vshrl.u32 %v712, 7
        %v714 = vsub.s32 %v711, %v713
        %v715 = vrot.slane %v707, %v714
        %v717 = vunpack.c.l.s4 1934713408
        %v718 = vunpack.c.0.s8 %v717
        %v719 = vlaneseq
        %v720 = vshrl.u32 %v719, 7
        %v721 = vsub.s32 %v718, %v720
        %v722 = vrot.slane %v708, %v721
        %v723 = vcombine.low %v690, %v706
        %v724 = vcombine.high %v690, %v706
        %v726 = vunpack.c.l.s4 1934713408
        %v727 = vunpack.c.0.s8 %v726
        %v728 = vlaneseq
        %v729 = vshrl.u32 %v728, 7
        %v730 = vsub.s32 %v727, %v729
        %v731 = vrot.slane %v723, %v730
        %v733 = vunpack.c.l.s4 1934713408
        %v734 = vunpack.c.0.s8 %v733
        %v735 = vlaneseq
        %v736 = vshrl.u32 %v735, 7
        %v737 = vsub.s32 %v734, %v736
        %v738 = vrot.slane %v724, %v737
        %v739 = vcombine.high %v715, 0.0
        %v740 = vcombine.high %v722, 0.0
        %v741 = vcombine.high %v731, 0.0
        %v742 = vcombine.high %v738, 0.0
        %v743 = vcombine.low %v654, %v662
        %v744 = vcombine.high %v654, %v662
        %v746 = vunpack.c.l.s4 1983009808
        %v747 = vunpack.c.0.s8 %v746
        %v748 = vlaneseq
        %v749 = vshrl.u32 %v748, 7
        %v750 = vsub.s32 %v747, %v749
        %v751 = vrot.slane %v743, %v750
        %v753 = vunpack.c.l.s4 1983009808
        %v754 = vunpack.c.0.s8 %v753
        %v755 = vlaneseq
        %v756 = vshrl.u32 %v755, 7
        %v757 = vsub.s32 %v754, %v756
        %v758 = vrot.slane %v744, %v757
        %v759 = vcombine.low %v658, %v666
        %v760 = vcombine.high %v658, %v666
        %v762 = vunpack.c.l.s4 1983009808
        %v763 = vunpack.c.0.s8 %v762
        %v764 = vlaneseq
        %v765 = vshrl.u32 %v764, 7
        %v766 = vsub.s32 %v763, %v765
        %v767 = vrot.slane %v759, %v766
        %v769 = vunpack.c.l.s4 1983009808
        %v770 = vunpack.c.0.s8 %v769
        %v771 = vlaneseq
        %v772 = vshrl.u32 %v771, 7
        %v773 = vsub.s32 %v770, %v772
        %v774 = vrot.slane %v760, %v773
        %v775 = vcombine.low %v751, %v767
        %v776 = vcombine.high %v751, %v767
        %v778 = vunpack.c.l.s4 1934713408
        %v779 = vunpack.c.0.s8 %v778
        %v780 = vlaneseq
        %v781 = vshrl.u32 %v780, 7
        %v782 = vsub.s32 %v779, %v781
        %v783 = vrot.slane %v775, %v782
        %v785 = vunpack.c.l.s4 1934713408
        %v786 = vunpack.c.0.s8 %v785
        %v787 = vlaneseq
        %v788 = vshrl.u32 %v787, 7
        %v789 = vsub.s32 %v786, %v788
        %v790 = vrot.slane %v776, %v789
        %v791 = vcombine.low %v758, %v774
        %v792 = vcombine.high %v758, %v774
        %v794 = vunpack.c.l.s4 1934713408
        %v795 = vunpack.c.0.s8 %v794
        %v796 = vlaneseq
        %v797 = vshrl.u32 %v796, 7
        %v798 = vsub.s32 %v795, %v797
        %v799 = vrot.slane %v791, %v798
        %v801 = vunpack.c.l.s4 1934713408
        %v802 = vunpack.c.0.s8 %v801
        %v803 = vlaneseq
        %v804 = vshrl.u32 %v803, 7
        %v805 = vsub.s32 %v802, %v804
        %v806 = vrot.slane %v792, %v805
        %v807 = vcombine.high %v783, 0.0
        %v808 = vcombine.high %v790, 0.0
        %v809 = vcombine.high %v799, 0.0
        %v810 = vcombine.high %v806, 0.0
        %812 = vrot.lane.b32.xlu0 %v739, 16
        %v813 = vpop.permute.xlu0 %812
        %816 = vrot.lane.b32.xlu0 %v722, 32
        %v817 = vpop.permute.xlu0 %816
        %820 = vrot.lane.b32.xlu0 %v740, 48
        %v821 = vpop.permute.xlu0 %820
        %824 = vrot.lane.b32.xlu0 %v731, 64
        %v825 = vpop.permute.xlu0 %824
        %828 = vrot.lane.b32.xlu0 %v741, 80
        %v829 = vpop.permute.xlu0 %828
        %832 = vrot.lane.b32.xlu0 %v738, 96
        %v833 = vpop.permute.xlu0 %832
        %836 = vrot.lane.b32.xlu0 %v742, 112
        %v837 = vpop.permute.xlu0 %836
        %840 = vrot.lane.b32.xlu0 %v807, 16
        %v841 = vpop.permute.xlu0 %840
        %844 = vrot.lane.b32.xlu0 %v790, 32
        %v845 = vpop.permute.xlu0 %844
        %848 = vrot.lane.b32.xlu0 %v808, 48
        %v849 = vpop.permute.xlu0 %848
        %852 = vrot.lane.b32.xlu0 %v799, 64
        %v853 = vpop.permute.xlu0 %852
        %856 = vrot.lane.b32.xlu0 %v809, 80
        %v857 = vpop.permute.xlu0 %856
        %860 = vrot.lane.b32.xlu0 %v806, 96
        %v861 = vpop.permute.xlu0 %860
        %864 = vrot.lane.b32.xlu0 %v810, 112
        %v865 = vpop.permute.xlu0 %864
        %v867 = vsel %vm613, %v715, %v813
        %v868 = vsel %vm615, %v867, %v817
        %v869 = vsel %vm617, %v868, %v821
        %v870 = vsel %vm619, %v869, %v825
        %v871 = vsel %vm621, %v870, %v829
        %v872 = vsel %vm623, %v871, %v833
        %v873 = vsel %vm625, %v872, %v837
        %v874 = vsel %vm613, %v783, %v841
        %v875 = vsel %vm615, %v874, %v845
        %v876 = vsel %vm617, %v875, %v849
        %v877 = vsel %vm619, %v876, %v853
        %v878 = vsel %vm621, %v877, %v857
        %v879 = vsel %vm623, %v878, %v861
        %v880 = vsel %vm625, %v879, %v865
        %v881 = vpack.c.bf16 %v873, %v873
        %v882 = vpack.c.bf16 %v880, %v880
        %v885 = vunpack.c.l.b16 %v881
        %v886 = vunpack.c.l.b16 %v882
        %v887 = vpack.c.b16 %v886, %v885
        %v888 = vrot.slane %v887, 6
        %890 = vst [vmem:[#allocation3] sm:$0xcc] %v888
        %891 = vrot.lane.b32.xlu0 %v397, 126
        %v892 = vpop.permute.xlu0 %891
        %893 = vrot.lane.b32.xlu0 %v398, 126
        %v894 = vpop.permute.xlu0 %893
        %895 = vrot.lane.b32.xlu0 %v400, 126
        %v896 = vpop.permute.xlu0 %895
        %897 = vrot.lane.b32.xlu0 %v401, 126
        %v898 = vpop.permute.xlu0 %897
        %899 = vrot.lane.b32.xlu0 %v403, 126
        %v900 = vpop.permute.xlu0 %899
        %901 = vrot.lane.b32.xlu0 %v404, 126
        %v902 = vpop.permute.xlu0 %901
        %903 = vrot.lane.b32.xlu0 %v406, 126
        %v904 = vpop.permute.xlu0 %903
        %905 = vrot.lane.b32.xlu0 %v407, 126
        %v906 = vpop.permute.xlu0 %905
        %v915 = vcombine.low %v892, %v900
        %v916 = vcombine.high %v892, %v900
        %v918 = vunpack.c.l.s4 1983009808
        %v919 = vunpack.c.0.s8 %v918
        %v920 = vlaneseq
        %v921 = vshrl.u32 %v920, 7
        %v922 = vsub.s32 %v919, %v921
        %v923 = vrot.slane %v915, %v922
        %v925 = vunpack.c.l.s4 1983009808
        %v926 = vunpack.c.0.s8 %v925
        %v927 = vlaneseq
        %v928 = vshrl.u32 %v927, 7
        %v929 = vsub.s32 %v926, %v928
        %v930 = vrot.slane %v916, %v929
        %v931 = vcombine.low %v896, %v904
        %v932 = vcombine.high %v896, %v904
        %v934 = vunpack.c.l.s4 1983009808
        %v935 = vunpack.c.0.s8 %v934
        %v936 = vlaneseq
        %v937 = vshrl.u32 %v936, 7
        %v938 = vsub.s32 %v935, %v937
        %v939 = vrot.slane %v931, %v938
        %v941 = vunpack.c.l.s4 1983009808
        %v942 = vunpack.c.0.s8 %v941
        %v943 = vlaneseq
        %v944 = vshrl.u32 %v943, 7
        %v945 = vsub.s32 %v942, %v944
        %v946 = vrot.slane %v932, %v945
        %v947 = vcombine.low %v923, %v939
        %v948 = vcombine.high %v923, %v939
        %v950 = vunpack.c.l.s4 1934713408
        %v951 = vunpack.c.0.s8 %v950
        %v952 = vlaneseq
        %v953 = vshrl.u32 %v952, 7
        %v954 = vsub.s32 %v951, %v953
        %v955 = vrot.slane %v947, %v954
        %v957 = vunpack.c.l.s4 1934713408
        %v958 = vunpack.c.0.s8 %v957
        %v959 = vlaneseq
        %v960 = vshrl.u32 %v959, 7
        %v961 = vsub.s32 %v958, %v960
        %v962 = vrot.slane %v948, %v961
        %v963 = vcombine.low %v930, %v946
        %v964 = vcombine.high %v930, %v946
        %v966 = vunpack.c.l.s4 1934713408
        %v967 = vunpack.c.0.s8 %v966
        %v968 = vlaneseq
        %v969 = vshrl.u32 %v968, 7
        %v970 = vsub.s32 %v967, %v969
        %v971 = vrot.slane %v963, %v970
        %v973 = vunpack.c.l.s4 1934713408
        %v974 = vunpack.c.0.s8 %v973
        %v975 = vlaneseq
        %v976 = vshrl.u32 %v975, 7
        %v977 = vsub.s32 %v974, %v976
        %v978 = vrot.slane %v964, %v977
        %v979 = vcombine.high %v955, 0.0
        %v980 = vcombine.high %v962, 0.0
        %v981 = vcombine.high %v971, 0.0
        %v982 = vcombine.high %v978, 0.0
        %v983 = vcombine.low %v894, %v902
        %v984 = vcombine.high %v894, %v902
        %v986 = vunpack.c.l.s4 1983009808
        %v987 = vunpack.c.0.s8 %v986
        %v988 = vlaneseq
        %v989 = vshrl.u32 %v988, 7
        %v990 = vsub.s32 %v987, %v989
        %v991 = vrot.slane %v983, %v990
        %v993 = vunpack.c.l.s4 1983009808
        %v994 = vunpack.c.0.s8 %v993
        %v995 = vlaneseq
        %v996 = vshrl.u32 %v995, 7
        %v997 = vsub.s32 %v994, %v996
        %v998 = vrot.slane %v984, %v997
        %v999 = vcombine.low %v898, %v906
        %v1000 = vcombine.high %v898, %v906
        %v1002 = vunpack.c.l.s4 1983009808
        %v1003 = vunpack.c.0.s8 %v1002
        %v1004 = vlaneseq
        %v1005 = vshrl.u32 %v1004, 7
        %v1006 = vsub.s32 %v1003, %v1005
        %v1007 = vrot.slane %v999, %v1006
        %v1009 = vunpack.c.l.s4 1983009808
        %v1010 = vunpack.c.0.s8 %v1009
        %v1011 = vlaneseq
        %v1012 = vshrl.u32 %v1011, 7
        %v1013 = vsub.s32 %v1010, %v1012
        %v1014 = vrot.slane %v1000, %v1013
        %v1015 = vcombine.low %v991, %v1007
        %v1016 = vcombine.high %v991, %v1007
        %v1018 = vunpack.c.l.s4 1934713408
        %v1019 = vunpack.c.0.s8 %v1018
        %v1020 = vlaneseq
        %v1021 = vshrl.u32 %v1020, 7
        %v1022 = vsub.s32 %v1019, %v1021
        %v1023 = vrot.slane %v1015, %v1022
        %v1025 = vunpack.c.l.s4 1934713408
        %v1026 = vunpack.c.0.s8 %v1025
        %v1027 = vlaneseq
        %v1028 = vshrl.u32 %v1027, 7
        %v1029 = vsub.s32 %v1026, %v1028
        %v1030 = vrot.slane %v1016, %v1029
        %v1031 = vcombine.low %v998, %v1014
        %v1032 = vcombine.high %v998, %v1014
        %v1034 = vunpack.c.l.s4 1934713408
        %v1035 = vunpack.c.0.s8 %v1034
        %v1036 = vlaneseq
        %v1037 = vshrl.u32 %v1036, 7
        %v1038 = vsub.s32 %v1035, %v1037
        %v1039 = vrot.slane %v1031, %v1038
        %v1041 = vunpack.c.l.s4 1934713408
        %v1042 = vunpack.c.0.s8 %v1041
        %v1043 = vlaneseq
        %v1044 = vshrl.u32 %v1043, 7
        %v1045 = vsub.s32 %v1042, %v1044
        %v1046 = vrot.slane %v1032, %v1045
        %v1047 = vcombine.high %v1023, 0.0
        %v1048 = vcombine.high %v1030, 0.0
        %v1049 = vcombine.high %v1039, 0.0
        %v1050 = vcombine.high %v1046, 0.0
        %1052 = vrot.lane.b32.xlu0 %v979, 16
        %v1053 = vpop.permute.xlu0 %1052
        %1056 = vrot.lane.b32.xlu0 %v962, 32
        %v1057 = vpop.permute.xlu0 %1056
        %1060 = vrot.lane.b32.xlu0 %v980, 48
        %v1061 = vpop.permute.xlu0 %1060
        %1064 = vrot.lane.b32.xlu0 %v971, 64
        %v1065 = vpop.permute.xlu0 %1064
        %1068 = vrot.lane.b32.xlu0 %v981, 80
        %v1069 = vpop.permute.xlu0 %1068
        %1072 = vrot.lane.b32.xlu0 %v978, 96
        %v1073 = vpop.permute.xlu0 %1072
        %1076 = vrot.lane.b32.xlu0 %v982, 112
        %v1077 = vpop.permute.xlu0 %1076
        %1080 = vrot.lane.b32.xlu0 %v1047, 16
        %v1081 = vpop.permute.xlu0 %1080
        %1084 = vrot.lane.b32.xlu0 %v1030, 32
        %v1085 = vpop.permute.xlu0 %1084
        %1088 = vrot.lane.b32.xlu0 %v1048, 48
        %v1089 = vpop.permute.xlu0 %1088
        %1092 = vrot.lane.b32.xlu0 %v1039, 64
        %v1093 = vpop.permute.xlu0 %1092
        %1096 = vrot.lane.b32.xlu0 %v1049, 80
        %v1097 = vpop.permute.xlu0 %1096
        %1100 = vrot.lane.b32.xlu0 %v1046, 96
        %v1101 = vpop.permute.xlu0 %1100
        %1104 = vrot.lane.b32.xlu0 %v1050, 112
        %v1105 = vpop.permute.xlu0 %1104
        %v1107 = vsel %vm613, %v955, %v1053
        %v1108 = vsel %vm615, %v1107, %v1057
        %v1109 = vsel %vm617, %v1108, %v1061
        %v1110 = vsel %vm619, %v1109, %v1065
        %v1111 = vsel %vm621, %v1110, %v1069
        %v1112 = vsel %vm623, %v1111, %v1073
        %v1113 = vsel %vm625, %v1112, %v1077
        %v1114 = vsel %vm613, %v1023, %v1081
        %v1115 = vsel %vm615, %v1114, %v1085
        %v1116 = vsel %vm617, %v1115, %v1089
        %v1117 = vsel %vm619, %v1116, %v1093
        %v1118 = vsel %vm621, %v1117, %v1097
        %v1119 = vsel %vm623, %v1118, %v1101
        %v1120 = vsel %vm625, %v1119, %v1105
        %v1121 = vpack.c.bf16 %v1113, %v1113
        %v1122 = vpack.c.bf16 %v1120, %v1120
        %v1125 = vunpack.c.l.b16 %v1121
        %v1126 = vunpack.c.l.b16 %v1122
        %v1127 = vpack.c.b16 %v1126, %v1125
        %1129 = vst [vmem:[#allocation3 + $0x8] sm:$0x33] %v1127
        %vm1134 = vcmask 1046528
        %v1135 = vrot.slane %v397, 1
        %v1136 = vrot.slane %v398, 1
        %v1137 = vsel %vm1134, %v1135, %v1136
        %v1138 = vrot.slane %v399, 1
        %v1139 = vsel %vm1134, %v1136, %v1138
        %v1140 = vrot.slane %v400, 1
        %v1141 = vrot.slane %v401, 1
        %v1142 = vsel %vm1134, %v1140, %v1141
        %v1143 = vrot.slane %v402, 1
        %v1144 = vsel %vm1134, %v1141, %v1143
        %v1145 = vrot.slane %v403, 1
        %v1146 = vrot.slane %v404, 1
        %v1147 = vsel %vm1134, %v1145, %v1146
        %v1148 = vrot.slane %v405, 1
        %v1149 = vsel %vm1134, %v1146, %v1148
        %v1150 = vrot.slane %v406, 1
        %v1151 = vrot.slane %v407, 1
        %v1152 = vsel %vm1134, %v1150, %v1151
        %v1153 = vrot.slane %v408, 1
        %v1154 = vsel %vm1134, %v1151, %v1153
        %v1163 = vcombine.low %v1137, %v1147
        %v1164 = vcombine.high %v1137, %v1147
        %v1166 = vunpack.c.l.s4 1983009808
        %v1167 = vunpack.c.0.s8 %v1166
        %v1168 = vlaneseq
        %v1169 = vshrl.u32 %v1168, 7
        %v1170 = vsub.s32 %v1167, %v1169
        %v1171 = vrot.slane %v1163, %v1170
        %v1173 = vunpack.c.l.s4 1983009808
        %v1174 = vunpack.c.0.s8 %v1173
        %v1175 = vlaneseq
        %v1176 = vshrl.u32 %v1175, 7
        %v1177 = vsub.s32 %v1174, %v1176
        %v1178 = vrot.slane %v1164, %v1177
        %v1179 = vcombine.low %v1142, %v1152
        %v1180 = vcombine.high %v1142, %v1152
        %v1182 = vunpack.c.l.s4 1983009808
        %v1183 = vunpack.c.0.s8 %v1182
        %v1184 = vlaneseq
        %v1185 = vshrl.u32 %v1184, 7
        %v1186 = vsub.s32 %v1183, %v1185
        %v1187 = vrot.slane %v1179, %v1186
        %v1189 = vunpack.c.l.s4 1983009808
        %v1190 = vunpack.c.0.s8 %v1189
        %v1191 = vlaneseq
        %v1192 = vshrl.u32 %v1191, 7
        %v1193 = vsub.s32 %v1190, %v1192
        %v1194 = vrot.slane %v1180, %v1193
        %v1195 = vcombine.low %v1171, %v1187
        %v1196 = vcombine.high %v1171, %v1187
        %v1198 = vunpack.c.l.s4 1934713408
        %v1199 = vunpack.c.0.s8 %v1198
        %v1200 = vlaneseq
        %v1201 = vshrl.u32 %v1200, 7
        %v1202 = vsub.s32 %v1199, %v1201
        %v1203 = vrot.slane %v1195, %v1202
        %v1205 = vunpack.c.l.s4 1934713408
        %v1206 = vunpack.c.0.s8 %v1205
        %v1207 = vlaneseq
        %v1208 = vshrl.u32 %v1207, 7
        %v1209 = vsub.s32 %v1206, %v1208
        %v1210 = vrot.slane %v1196, %v1209
        %v1211 = vcombine.low %v1178, %v1194
        %v1212 = vcombine.high %v1178, %v1194
        %v1214 = vunpack.c.l.s4 1934713408
        %v1215 = vunpack.c.0.s8 %v1214
        %v1216 = vlaneseq
        %v1217 = vshrl.u32 %v1216, 7
        %v1218 = vsub.s32 %v1215, %v1217
        %v1219 = vrot.slane %v1211, %v1218
        %v1221 = vunpack.c.l.s4 1934713408
        %v1222 = vunpack.c.0.s8 %v1221
        %v1223 = vlaneseq
        %v1224 = vshrl.u32 %v1223, 7
        %v1225 = vsub.s32 %v1222, %v1224
        %v1226 = vrot.slane %v1212, %v1225
        %v1227 = vcombine.high %v1203, 0.0
        %v1228 = vcombine.high %v1210, 0.0
        %v1229 = vcombine.high %v1219, 0.0
        %v1230 = vcombine.high %v1226, 0.0
        %v1231 = vcombine.low %v1139, %v1149
        %v1232 = vcombine.high %v1139, %v1149
        %v1234 = vunpack.c.l.s4 1983009808
        %v1235 = vunpack.c.0.s8 %v1234
        %v1236 = vlaneseq
        %v1237 = vshrl.u32 %v1236, 7
        %v1238 = vsub.s32 %v1235, %v1237
        %v1239 = vrot.slane %v1231, %v1238
        %v1241 = vunpack.c.l.s4 1983009808
        %v1242 = vunpack.c.0.s8 %v1241
        %v1243 = vlaneseq
        %v1244 = vshrl.u32 %v1243, 7
        %v1245 = vsub.s32 %v1242, %v1244
        %v1246 = vrot.slane %v1232, %v1245
        %v1247 = vcombine.low %v1144, %v1154
        %v1248 = vcombine.high %v1144, %v1154
        %v1250 = vunpack.c.l.s4 1983009808
        %v1251 = vunpack.c.0.s8 %v1250
        %v1252 = vlaneseq
        %v1253 = vshrl.u32 %v1252, 7
        %v1254 = vsub.s32 %v1251, %v1253
        %v1255 = vrot.slane %v1247, %v1254
        %v1257 = vunpack.c.l.s4 1983009808
        %v1258 = vunpack.c.0.s8 %v1257
        %v1259 = vlaneseq
        %v1260 = vshrl.u32 %v1259, 7
        %v1261 = vsub.s32 %v1258, %v1260
        %v1262 = vrot.slane %v1248, %v1261
        %v1263 = vcombine.low %v1239, %v1255
        %v1264 = vcombine.high %v1239, %v1255
        %v1266 = vunpack.c.l.s4 1934713408
        %v1267 = vunpack.c.0.s8 %v1266
        %v1268 = vlaneseq
        %v1269 = vshrl.u32 %v1268, 7
        %v1270 = vsub.s32 %v1267, %v1269
        %v1271 = vrot.slane %v1263, %v1270
        %v1273 = vunpack.c.l.s4 1934713408
        %v1274 = vunpack.c.0.s8 %v1273
        %v1275 = vlaneseq
        %v1276 = vshrl.u32 %v1275, 7
        %v1277 = vsub.s32 %v1274, %v1276
        %v1278 = vrot.slane %v1264, %v1277
        %v1279 = vcombine.low %v1246, %v1262
        %v1280 = vcombine.high %v1246, %v1262
        %v1282 = vunpack.c.l.s4 1934713408
        %v1283 = vunpack.c.0.s8 %v1282
        %v1284 = vlaneseq
        %v1285 = vshrl.u32 %v1284, 7
        %v1286 = vsub.s32 %v1283, %v1285
        %v1287 = vrot.slane %v1279, %v1286
        %v1289 = vunpack.c.l.s4 1934713408
        %v1290 = vunpack.c.0.s8 %v1289
        %v1291 = vlaneseq
        %v1292 = vshrl.u32 %v1291, 7
        %v1293 = vsub.s32 %v1290, %v1292
        %v1294 = vrot.slane %v1280, %v1293
        %v1295 = vcombine.high %v1271, 0.0
        %v1296 = vcombine.high %v1278, 0.0
        %v1297 = vcombine.high %v1287, 0.0
        %v1298 = vcombine.high %v1294, 0.0
        %1300 = vrot.lane.b32.xlu0 %v1227, 16
        %v1301 = vpop.permute.xlu0 %1300
        %1304 = vrot.lane.b32.xlu0 %v1210, 32
        %v1305 = vpop.permute.xlu0 %1304
        %1308 = vrot.lane.b32.xlu0 %v1228, 48
        %v1309 = vpop.permute.xlu0 %1308
        %1312 = vrot.lane.b32.xlu0 %v1219, 64
        %v1313 = vpop.permute.xlu0 %1312
        %1316 = vrot.lane.b32.xlu0 %v1229, 80
        %v1317 = vpop.permute.xlu0 %1316
        %1320 = vrot.lane.b32.xlu0 %v1226, 96
        %v1321 = vpop.permute.xlu0 %1320
        %1324 = vrot.lane.b32.xlu0 %v1230, 112
        %v1325 = vpop.permute.xlu0 %1324
        %1328 = vrot.lane.b32.xlu0 %v1295, 16
        %v1329 = vpop.permute.xlu0 %1328
        %1332 = vrot.lane.b32.xlu0 %v1278, 32
        %v1333 = vpop.permute.xlu0 %1332
        %1336 = vrot.lane.b32.xlu0 %v1296, 48
        %v1337 = vpop.permute.xlu0 %1336
        %1340 = vrot.lane.b32.xlu0 %v1287, 64
        %v1341 = vpop.permute.xlu0 %1340
        %1344 = vrot.lane.b32.xlu0 %v1297, 80
        %v1345 = vpop.permute.xlu0 %1344
        %1348 = vrot.lane.b32.xlu0 %v1294, 96
        %v1349 = vpop.permute.xlu0 %1348
        %1352 = vrot.lane.b32.xlu0 %v1298, 112
        %v1353 = vpop.permute.xlu0 %1352
        %v1355 = vsel %vm613, %v1203, %v1301
        %v1356 = vsel %vm615, %v1355, %v1305
        %v1357 = vsel %vm617, %v1356, %v1309
        %v1358 = vsel %vm619, %v1357, %v1313
        %v1359 = vsel %vm621, %v1358, %v1317
        %v1360 = vsel %vm623, %v1359, %v1321
        %v1361 = vsel %vm625, %v1360, %v1325
        %v1362 = vsel %vm613, %v1271, %v1329
        %v1363 = vsel %vm615, %v1362, %v1333
        %v1364 = vsel %vm617, %v1363, %v1337
        %v1365 = vsel %vm619, %v1364, %v1341
        %v1366 = vsel %vm621, %v1365, %v1345
        %v1367 = vsel %vm623, %v1366, %v1349
        %v1368 = vsel %vm625, %v1367, %v1353
        %v1369 = vpack.c.bf16 %v1361, %v1361
        %v1370 = vpack.c.bf16 %v1368, %v1368
        %v1373 = vunpack.c.l.b16 %v1369
        %v1374 = vunpack.c.l.b16 %v1370
        %v1375 = vpack.c.b16 %v1374, %v1373
        %v1376 = vrot.slane %v1375, 6
        %1378 = vst [vmem:[#allocation3 + $0x8] sm:$0xcc] %v1376
        %1379 = vrot.lane.b32.xlu0 %v1137, 127
        %v1380 = vpop.permute.xlu0 %1379
        %1381 = vrot.lane.b32.xlu0 %v1139, 127
        %v1382 = vpop.permute.xlu0 %1381
        %1383 = vrot.lane.b32.xlu0 %v1142, 127
        %v1384 = vpop.permute.xlu0 %1383
        %1385 = vrot.lane.b32.xlu0 %v1144, 127
        %v1386 = vpop.permute.xlu0 %1385
        %1387 = vrot.lane.b32.xlu0 %v1147, 127
        %v1388 = vpop.permute.xlu0 %1387
        %1389 = vrot.lane.b32.xlu0 %v1149, 127
        %v1390 = vpop.permute.xlu0 %1389
        %1391 = vrot.lane.b32.xlu0 %v1152, 127
        %v1392 = vpop.permute.xlu0 %1391
        %1393 = vrot.lane.b32.xlu0 %v1154, 127
        %v1394 = vpop.permute.xlu0 %1393
        %v1403 = vcombine.low %v1380, %v1388
        %v1404 = vcombine.high %v1380, %v1388
        %v1406 = vunpack.c.l.s4 1983009808
        %v1407 = vunpack.c.0.s8 %v1406
        %v1408 = vlaneseq
        %v1409 = vshrl.u32 %v1408, 7
        %v1410 = vsub.s32 %v1407, %v1409
        %v1411 = vrot.slane %v1403, %v1410
        %v1413 = vunpack.c.l.s4 1983009808
        %v1414 = vunpack.c.0.s8 %v1413
        %v1415 = vlaneseq
        %v1416 = vshrl.u32 %v1415, 7
        %v1417 = vsub.s32 %v1414, %v1416
        %v1418 = vrot.slane %v1404, %v1417
        %v1419 = vcombine.low %v1384, %v1392
        %v1420 = vcombine.high %v1384, %v1392
        %v1422 = vunpack.c.l.s4 1983009808
        %v1423 = vunpack.c.0.s8 %v1422
        %v1424 = vlaneseq
        %v1425 = vshrl.u32 %v1424, 7
        %v1426 = vsub.s32 %v1423, %v1425
        %v1427 = vrot.slane %v1419, %v1426
        %v1429 = vunpack.c.l.s4 1983009808
        %v1430 = vunpack.c.0.s8 %v1429
        %v1431 = vlaneseq
        %v1432 = vshrl.u32 %v1431, 7
        %v1433 = vsub.s32 %v1430, %v1432
        %v1434 = vrot.slane %v1420, %v1433
        %v1435 = vcombine.low %v1411, %v1427
        %v1436 = vcombine.high %v1411, %v1427
        %v1438 = vunpack.c.l.s4 1934713408
        %v1439 = vunpack.c.0.s8 %v1438
        %v1440 = vlaneseq
        %v1441 = vshrl.u32 %v1440, 7
        %v1442 = vsub.s32 %v1439, %v1441
        %v1443 = vrot.slane %v1435, %v1442
        %v1445 = vunpack.c.l.s4 1934713408
        %v1446 = vunpack.c.0.s8 %v1445
        %v1447 = vlaneseq
        %v1448 = vshrl.u32 %v1447, 7
        %v1449 = vsub.s32 %v1446, %v1448
        %v1450 = vrot.slane %v1436, %v1449
        %v1451 = vcombine.low %v1418, %v1434
        %v1452 = vcombine.high %v1418, %v1434
        %v1454 = vunpack.c.l.s4 1934713408
        %v1455 = vunpack.c.0.s8 %v1454
        %v1456 = vlaneseq
        %v1457 = vshrl.u32 %v1456, 7
        %v1458 = vsub.s32 %v1455, %v1457
        %v1459 = vrot.slane %v1451, %v1458
        %v1461 = vunpack.c.l.s4 1934713408
        %v1462 = vunpack.c.0.s8 %v1461
        %v1463 = vlaneseq
        %v1464 = vshrl.u32 %v1463, 7
        %v1465 = vsub.s32 %v1462, %v1464
        %v1466 = vrot.slane %v1452, %v1465
        %v1467 = vcombine.high %v1443, 0.0
        %v1468 = vcombine.high %v1450, 0.0
        %v1469 = vcombine.high %v1459, 0.0
        %v1470 = vcombine.high %v1466, 0.0
        %v1471 = vcombine.low %v1382, %v1390
        %v1472 = vcombine.high %v1382, %v1390
        %v1474 = vunpack.c.l.s4 1983009808
        %v1475 = vunpack.c.0.s8 %v1474
        %v1476 = vlaneseq
        %v1477 = vshrl.u32 %v1476, 7
        %v1478 = vsub.s32 %v1475, %v1477
        %v1479 = vrot.slane %v1471, %v1478
        %v1481 = vunpack.c.l.s4 1983009808
        %v1482 = vunpack.c.0.s8 %v1481
        %v1483 = vlaneseq
        %v1484 = vshrl.u32 %v1483, 7
        %v1485 = vsub.s32 %v1482, %v1484
        %v1486 = vrot.slane %v1472, %v1485
        %v1487 = vcombine.low %v1386, %v1394
        %v1488 = vcombine.high %v1386, %v1394
        %v1490 = vunpack.c.l.s4 1983009808
        %v1491 = vunpack.c.0.s8 %v1490
        %v1492 = vlaneseq
        %v1493 = vshrl.u32 %v1492, 7
        %v1494 = vsub.s32 %v1491, %v1493
        %v1495 = vrot.slane %v1487, %v1494
        %v1497 = vunpack.c.l.s4 1983009808
        %v1498 = vunpack.c.0.s8 %v1497
        %v1499 = vlaneseq
        %v1500 = vshrl.u32 %v1499, 7
        %v1501 = vsub.s32 %v1498, %v1500
        %v1502 = vrot.slane %v1488, %v1501
        %v1503 = vcombine.low %v1479, %v1495
        %v1504 = vcombine.high %v1479, %v1495
        %v1506 = vunpack.c.l.s4 1934713408
        %v1507 = vunpack.c.0.s8 %v1506
        %v1508 = vlaneseq
        %v1509 = vshrl.u32 %v1508, 7
        %v1510 = vsub.s32 %v1507, %v1509
        %v1511 = vrot.slane %v1503, %v1510
        %v1513 = vunpack.c.l.s4 1934713408
        %v1514 = vunpack.c.0.s8 %v1513
        %v1515 = vlaneseq
        %v1516 = vshrl.u32 %v1515, 7
        %v1517 = vsub.s32 %v1514, %v1516
        %v1518 = vrot.slane %v1504, %v1517
        %v1519 = vcombine.low %v1486, %v1502
        %v1520 = vcombine.high %v1486, %v1502
        %v1522 = vunpack.c.l.s4 1934713408
        %v1523 = vunpack.c.0.s8 %v1522
        %v1524 = vlaneseq
        %v1525 = vshrl.u32 %v1524, 7
        %v1526 = vsub.s32 %v1523, %v1525
        %v1527 = vrot.slane %v1519, %v1526
        %v1529 = vunpack.c.l.s4 1934713408
        %v1530 = vunpack.c.0.s8 %v1529
        %v1531 = vlaneseq
        %v1532 = vshrl.u32 %v1531, 7
        %v1533 = vsub.s32 %v1530, %v1532
        %v1534 = vrot.slane %v1520, %v1533
        %v1535 = vcombine.high %v1511, 0.0
        %v1536 = vcombine.high %v1518, 0.0
        %v1537 = vcombine.high %v1527, 0.0
        %v1538 = vcombine.high %v1534, 0.0
        %1540 = vrot.lane.b32.xlu0 %v1467, 16
        %v1541 = vpop.permute.xlu0 %1540
        %1544 = vrot.lane.b32.xlu0 %v1450, 32
        %v1545 = vpop.permute.xlu0 %1544
        %1548 = vrot.lane.b32.xlu0 %v1468, 48
        %v1549 = vpop.permute.xlu0 %1548
        %1552 = vrot.lane.b32.xlu0 %v1459, 64
        %v1553 = vpop.permute.xlu0 %1552
        %1556 = vrot.lane.b32.xlu0 %v1469, 80
        %v1557 = vpop.permute.xlu0 %1556
        %1560 = vrot.lane.b32.xlu0 %v1466, 96
        %v1561 = vpop.permute.xlu0 %1560
        %1564 = vrot.lane.b32.xlu0 %v1470, 112
        %v1565 = vpop.permute.xlu0 %1564
        %1568 = vrot.lane.b32.xlu0 %v1535, 16
        %v1569 = vpop.permute.xlu0 %1568
        %1572 = vrot.lane.b32.xlu0 %v1518, 32
        %v1573 = vpop.permute.xlu0 %1572
        %1576 = vrot.lane.b32.xlu0 %v1536, 48
        %v1577 = vpop.permute.xlu0 %1576
        %1580 = vrot.lane.b32.xlu0 %v1527, 64
        %v1581 = vpop.permute.xlu0 %1580
        %1584 = vrot.lane.b32.xlu0 %v1537, 80
        %v1585 = vpop.permute.xlu0 %1584
        %1588 = vrot.lane.b32.xlu0 %v1534, 96
        %v1589 = vpop.permute.xlu0 %1588
        %1592 = vrot.lane.b32.xlu0 %v1538, 112
        %v1593 = vpop.permute.xlu0 %1592
        %v1595 = vsel %vm613, %v1443, %v1541
        %v1596 = vsel %vm615, %v1595, %v1545
        %v1597 = vsel %vm617, %v1596, %v1549
        %v1598 = vsel %vm619, %v1597, %v1553
        %v1599 = vsel %vm621, %v1598, %v1557
        %v1600 = vsel %vm623, %v1599, %v1561
        %v1601 = vsel %vm625, %v1600, %v1565
        %v1602 = vsel %vm613, %v1511, %v1569
        %v1603 = vsel %vm615, %v1602, %v1573
        %v1604 = vsel %vm617, %v1603, %v1577
        %v1605 = vsel %vm619, %v1604, %v1581
        %v1606 = vsel %vm621, %v1605, %v1585
        %v1607 = vsel %vm623, %v1606, %v1589
        %v1608 = vsel %vm625, %v1607, %v1593
        %v1609 = vpack.c.bf16 %v1601, %v1601
        %v1610 = vpack.c.bf16 %v1608, %v1608
        %v1613 = vunpack.c.l.b16 %v1609
        %v1614 = vunpack.c.l.b16 %v1610
        %v1615 = vpack.c.b16 %v1614, %v1613
        %1617 = vst [vmem:[#allocation3 + $0x10] sm:$0x33] %v1615
        %1618 = vrot.lane.b32.xlu0 %v1137, 126
        %v1619 = vpop.permute.xlu0 %1618
        %1620 = vrot.lane.b32.xlu0 %v1139, 126
        %v1621 = vpop.permute.xlu0 %1620
        %1622 = vrot.lane.b32.xlu0 %v1142, 126
        %v1623 = vpop.permute.xlu0 %1622
        %1624 = vrot.lane.b32.xlu0 %v1144, 126
        %v1625 = vpop.permute.xlu0 %1624
        %1626 = vrot.lane.b32.xlu0 %v1147, 126
        %v1627 = vpop.permute.xlu0 %1626
        %1628 = vrot.lane.b32.xlu0 %v1149, 126
        %v1629 = vpop.permute.xlu0 %1628
        %1630 = vrot.lane.b32.xlu0 %v1152, 126
        %v1631 = vpop.permute.xlu0 %1630
        %1632 = vrot.lane.b32.xlu0 %v1154, 126
        %v1633 = vpop.permute.xlu0 %1632
        %v1642 = vcombine.low %v1619, %v1627
        %v1643 = vcombine.high %v1619, %v1627
        %v1645 = vunpack.c.l.s4 1983009808
        %v1646 = vunpack.c.0.s8 %v1645
        %v1647 = vlaneseq
        %v1648 = vshrl.u32 %v1647, 7
        %v1649 = vsub.s32 %v1646, %v1648
        %v1650 = vrot.slane %v1642, %v1649
        %v1652 = vunpack.c.l.s4 1983009808
        %v1653 = vunpack.c.0.s8 %v1652
        %v1654 = vlaneseq
        %v1655 = vshrl.u32 %v1654, 7
        %v1656 = vsub.s32 %v1653, %v1655
        %v1657 = vrot.slane %v1643, %v1656
        %v1658 = vcombine.low %v1623, %v1631
        %v1659 = vcombine.high %v1623, %v1631
        %v1661 = vunpack.c.l.s4 1983009808
        %v1662 = vunpack.c.0.s8 %v1661
        %v1663 = vlaneseq
        %v1664 = vshrl.u32 %v1663, 7
        %v1665 = vsub.s32 %v1662, %v1664
        %v1666 = vrot.slane %v1658, %v1665
        %v1668 = vunpack.c.l.s4 1983009808
        %v1669 = vunpack.c.0.s8 %v1668
        %v1670 = vlaneseq
        %v1671 = vshrl.u32 %v1670, 7
        %v1672 = vsub.s32 %v1669, %v1671
        %v1673 = vrot.slane %v1659, %v1672
        %v1674 = vcombine.low %v1650, %v1666
        %v1675 = vcombine.high %v1650, %v1666
        %v1677 = vunpack.c.l.s4 1934713408
        %v1678 = vunpack.c.0.s8 %v1677
        %v1679 = vlaneseq
        %v1680 = vshrl.u32 %v1679, 7
        %v1681 = vsub.s32 %v1678, %v1680
        %v1682 = vrot.slane %v1674, %v1681
        %v1684 = vunpack.c.l.s4 1934713408
        %v1685 = vunpack.c.0.s8 %v1684
        %v1686 = vlaneseq
        %v1687 = vshrl.u32 %v1686, 7
        %v1688 = vsub.s32 %v1685, %v1687
        %v1689 = vrot.slane %v1675, %v1688
        %v1690 = vcombine.low %v1657, %v1673
        %v1691 = vcombine.high %v1657, %v1673
        %v1693 = vunpack.c.l.s4 1934713408
        %v1694 = vunpack.c.0.s8 %v1693
        %v1695 = vlaneseq
        %v1696 = vshrl.u32 %v1695, 7
        %v1697 = vsub.s32 %v1694, %v1696
        %v1698 = vrot.slane %v1690, %v1697
        %v1700 = vunpack.c.l.s4 1934713408
        %v1701 = vunpack.c.0.s8 %v1700
        %v1702 = vlaneseq
        %v1703 = vshrl.u32 %v1702, 7
        %v1704 = vsub.s32 %v1701, %v1703
        %v1705 = vrot.slane %v1691, %v1704
        %v1706 = vcombine.high %v1682, 0.0
        %v1707 = vcombine.high %v1689, 0.0
        %v1708 = vcombine.high %v1698, 0.0
        %v1709 = vcombine.high %v1705, 0.0
        %v1710 = vcombine.low %v1621, %v1629
        %v1711 = vcombine.high %v1621, %v1629
        %v1713 = vunpack.c.l.s4 1983009808
        %v1714 = vunpack.c.0.s8 %v1713
        %v1715 = vlaneseq
        %v1716 = vshrl.u32 %v1715, 7
        %v1717 = vsub.s32 %v1714, %v1716
        %v1718 = vrot.slane %v1710, %v1717
        %v1720 = vunpack.c.l.s4 1983009808
        %v1721 = vunpack.c.0.s8 %v1720
        %v1722 = vlaneseq
        %v1723 = vshrl.u32 %v1722, 7
        %v1724 = vsub.s32 %v1721, %v1723
        %v1725 = vrot.slane %v1711, %v1724
        %v1726 = vcombine.low %v1625, %v1633
        %v1727 = vcombine.high %v1625, %v1633
        %v1729 = vunpack.c.l.s4 1983009808
        %v1730 = vunpack.c.0.s8 %v1729
        %v1731 = vlaneseq
        %v1732 = vshrl.u32 %v1731, 7
        %v1733 = vsub.s32 %v1730, %v1732
        %v1734 = vrot.slane %v1726, %v1733
        %v1736 = vunpack.c.l.s4 1983009808
        %v1737 = vunpack.c.0.s8 %v1736
        %v1738 = vlaneseq
        %v1739 = vshrl.u32 %v1738, 7
        %v1740 = vsub.s32 %v1737, %v1739
        %v1741 = vrot.slane %v1727, %v1740
        %v1742 = vcombine.low %v1718, %v1734
        %v1743 = vcombine.high %v1718, %v1734
        %v1745 = vunpack.c.l.s4 1934713408
        %v1746 = vunpack.c.0.s8 %v1745
        %v1747 = vlaneseq
        %v1748 = vshrl.u32 %v1747, 7
        %v1749 = vsub.s32 %v1746, %v1748
        %v1750 = vrot.slane %v1742, %v1749
        %v1752 = vunpack.c.l.s4 1934713408
        %v1753 = vunpack.c.0.s8 %v1752
        %v1754 = vlaneseq
        %v1755 = vshrl.u32 %v1754, 7
        %v1756 = vsub.s32 %v1753, %v1755
        %v1757 = vrot.slane %v1743, %v1756
        %v1758 = vcombine.low %v1725, %v1741
        %v1759 = vcombine.high %v1725, %v1741
        %v1761 = vunpack.c.l.s4 1934713408
        %v1762 = vunpack.c.0.s8 %v1761
        %v1763 = vlaneseq
        %v1764 = vshrl.u32 %v1763, 7
        %v1765 = vsub.s32 %v1762, %v1764
        %v1766 = vrot.slane %v1758, %v1765
        %v1768 = vunpack.c.l.s4 1934713408
        %v1769 = vunpack.c.0.s8 %v1768
        %v1770 = vlaneseq
        %v1771 = vshrl.u32 %v1770, 7
        %v1772 = vsub.s32 %v1769, %v1771
        %v1773 = vrot.slane %v1759, %v1772
        %v1774 = vcombine.high %v1750, 0.0
        %v1775 = vcombine.high %v1757, 0.0
        %v1776 = vcombine.high %v1766, 0.0
        %v1777 = vcombine.high %v1773, 0.0
        %1779 = vrot.lane.b32.xlu0 %v1706, 16
        %v1780 = vpop.permute.xlu0 %1779
        %1783 = vrot.lane.b32.xlu0 %v1689, 32
        %v1784 = vpop.permute.xlu0 %1783
        %1787 = vrot.lane.b32.xlu0 %v1707, 48
        %v1788 = vpop.permute.xlu0 %1787
        %1791 = vrot.lane.b32.xlu0 %v1698, 64
        %v1792 = vpop.permute.xlu0 %1791
        %1795 = vrot.lane.b32.xlu0 %v1708, 80
        %v1796 = vpop.permute.xlu0 %1795
        %1799 = vrot.lane.b32.xlu0 %v1705, 96
        %v1800 = vpop.permute.xlu0 %1799
        %1803 = vrot.lane.b32.xlu0 %v1709, 112
        %v1804 = vpop.permute.xlu0 %1803
        %1807 = vrot.lane.b32.xlu0 %v1774, 16
        %v1808 = vpop.permute.xlu0 %1807
        %1811 = vrot.lane.b32.xlu0 %v1757, 32
        %v1812 = vpop.permute.xlu0 %1811
        %1815 = vrot.lane.b32.xlu0 %v1775, 48
        %v1816 = vpop.permute.xlu0 %1815
        %1819 = vrot.lane.b32.xlu0 %v1766, 64
        %v1820 = vpop.permute.xlu0 %1819
        %1823 = vrot.lane.b32.xlu0 %v1776, 80
        %v1824 = vpop.permute.xlu0 %1823
        %1827 = vrot.lane.b32.xlu0 %v1773, 96
        %v1828 = vpop.permute.xlu0 %1827
        %1831 = vrot.lane.b32.xlu0 %v1777, 112
        %v1832 = vpop.permute.xlu0 %1831
        %v1834 = vsel %vm613, %v1682, %v1780
        %v1835 = vsel %vm615, %v1834, %v1784
        %v1836 = vsel %vm617, %v1835, %v1788
        %v1837 = vsel %vm619, %v1836, %v1792
        %v1838 = vsel %vm621, %v1837, %v1796
        %v1839 = vsel %vm623, %v1838, %v1800
        %v1840 = vsel %vm625, %v1839, %v1804
        %v1841 = vsel %vm613, %v1750, %v1808
        %v1842 = vsel %vm615, %v1841, %v1812
        %v1843 = vsel %vm617, %v1842, %v1816
        %v1844 = vsel %vm619, %v1843, %v1820
        %v1845 = vsel %vm621, %v1844, %v1824
        %v1846 = vsel %vm623, %v1845, %v1828
        %v1847 = vsel %vm625, %v1846, %v1832
        %v1848 = vpack.c.bf16 %v1840, %v1840
        %v1849 = vpack.c.bf16 %v1847, %v1847
        %v1852 = vunpack.c.l.b16 %v1848
        %v1853 = vunpack.c.l.b16 %v1849
        %v1854 = vpack.c.b16 %v1853, %v1852
        %v1855 = vrot.slane %v1854, 6
        %1857 = vst [vmem:[#allocation3 + $0x10] sm:$0xcc] %v1855
        %vm1858 = vcmask 1045504
        %v1859 = vrot.slane %v397, 2
        %v1860 = vrot.slane %v398, 2
        %v1861 = vsel %vm1858, %v1859, %v1860
        %v1862 = vrot.slane %v399, 2
        %v1863 = vsel %vm1858, %v1860, %v1862
        %v1864 = vrot.slane %v400, 2
        %v1865 = vrot.slane %v401, 2
        %v1866 = vsel %vm1858, %v1864, %v1865
        %v1867 = vrot.slane %v402, 2
        %v1868 = vsel %vm1858, %v1865, %v1867
        %v1869 = vrot.slane %v403, 2
        %v1870 = vrot.slane %v404, 2
        %v1871 = vsel %vm1858, %v1869, %v1870
        %v1872 = vrot.slane %v405, 2
        %v1873 = vsel %vm1858, %v1870, %v1872
        %v1874 = vrot.slane %v406, 2
        %v1875 = vrot.slane %v407, 2
        %v1876 = vsel %vm1858, %v1874, %v1875
        %v1877 = vrot.slane %v408, 2
        %v1878 = vsel %vm1858, %v1875, %v1877
        %v1887 = vcombine.low %v1861, %v1871
        %v1888 = vcombine.high %v1861, %v1871
        %v1890 = vunpack.c.l.s4 1983009808
        %v1891 = vunpack.c.0.s8 %v1890
        %v1892 = vlaneseq
        %v1893 = vshrl.u32 %v1892, 7
        %v1894 = vsub.s32 %v1891, %v1893
        %v1895 = vrot.slane %v1887, %v1894
        %v1897 = vunpack.c.l.s4 1983009808
        %v1898 = vunpack.c.0.s8 %v1897
        %v1899 = vlaneseq
        %v1900 = vshrl.u32 %v1899, 7
        %v1901 = vsub.s32 %v1898, %v1900
        %v1902 = vrot.slane %v1888, %v1901
        %v1903 = vcombine.low %v1866, %v1876
        %v1904 = vcombine.high %v1866, %v1876
        %v1906 = vunpack.c.l.s4 1983009808
        %v1907 = vunpack.c.0.s8 %v1906
        %v1908 = vlaneseq
        %v1909 = vshrl.u32 %v1908, 7
        %v1910 = vsub.s32 %v1907, %v1909
        %v1911 = vrot.slane %v1903, %v1910
        %v1913 = vunpack.c.l.s4 1983009808
        %v1914 = vunpack.c.0.s8 %v1913
        %v1915 = vlaneseq
        %v1916 = vshrl.u32 %v1915, 7
        %v1917 = vsub.s32 %v1914, %v1916
        %v1918 = vrot.slane %v1904, %v1917
        %v1919 = vcombine.low %v1895, %v1911
        %v1920 = vcombine.high %v1895, %v1911
        %v1922 = vunpack.c.l.s4 1934713408
        %v1923 = vunpack.c.0.s8 %v1922
        %v1924 = vlaneseq
        %v1925 = vshrl.u32 %v1924, 7
        %v1926 = vsub.s32 %v1923, %v1925
        %v1927 = vrot.slane %v1919, %v1926
        %v1929 = vunpack.c.l.s4 1934713408
        %v1930 = vunpack.c.0.s8 %v1929
        %v1931 = vlaneseq
        %v1932 = vshrl.u32 %v1931, 7
        %v1933 = vsub.s32 %v1930, %v1932
        %v1934 = vrot.slane %v1920, %v1933
        %v1935 = vcombine.low %v1902, %v1918
        %v1936 = vcombine.high %v1902, %v1918
        %v1938 = vunpack.c.l.s4 1934713408
        %v1939 = vunpack.c.0.s8 %v1938
        %v1940 = vlaneseq
        %v1941 = vshrl.u32 %v1940, 7
        %v1942 = vsub.s32 %v1939, %v1941
        %v1943 = vrot.slane %v1935, %v1942
        %v1945 = vunpack.c.l.s4 1934713408
        %v1946 = vunpack.c.0.s8 %v1945
        %v1947 = vlaneseq
        %v1948 = vshrl.u32 %v1947, 7
        %v1949 = vsub.s32 %v1946, %v1948
        %v1950 = vrot.slane %v1936, %v1949
        %v1951 = vcombine.high %v1927, 0.0
        %v1952 = vcombine.high %v1934, 0.0
        %v1953 = vcombine.high %v1943, 0.0
        %v1954 = vcombine.high %v1950, 0.0
        %v1955 = vcombine.low %v1863, %v1873
        %v1956 = vcombine.high %v1863, %v1873
        %v1958 = vunpack.c.l.s4 1983009808
        %v1959 = vunpack.c.0.s8 %v1958
        %v1960 = vlaneseq
        %v1961 = vshrl.u32 %v1960, 7
        %v1962 = vsub.s32 %v1959, %v1961
        %v1963 = vrot.slane %v1955, %v1962
        %v1965 = vunpack.c.l.s4 1983009808
        %v1966 = vunpack.c.0.s8 %v1965
        %v1967 = vlaneseq
        %v1968 = vshrl.u32 %v1967, 7
        %v1969 = vsub.s32 %v1966, %v1968
        %v1970 = vrot.slane %v1956, %v1969
        %v1971 = vcombine.low %v1868, %v1878
        %v1972 = vcombine.high %v1868, %v1878
        %v1974 = vunpack.c.l.s4 1983009808
        %v1975 = vunpack.c.0.s8 %v1974
        %v1976 = vlaneseq
        %v1977 = vshrl.u32 %v1976, 7
        %v1978 = vsub.s32 %v1975, %v1977
        %v1979 = vrot.slane %v1971, %v1978
        %v1981 = vunpack.c.l.s4 1983009808
        %v1982 = vunpack.c.0.s8 %v1981
        %v1983 = vlaneseq
        %v1984 = vshrl.u32 %v1983, 7
        %v1985 = vsub.s32 %v1982, %v1984
        %v1986 = vrot.slane %v1972, %v1985
        %v1987 = vcombine.low %v1963, %v1979
        %v1988 = vcombine.high %v1963, %v1979
        %v1990 = vunpack.c.l.s4 1934713408
        %v1991 = vunpack.c.0.s8 %v1990
        %v1992 = vlaneseq
        %v1993 = vshrl.u32 %v1992, 7
        %v1994 = vsub.s32 %v1991, %v1993
        %v1995 = vrot.slane %v1987, %v1994
        %v1997 = vunpack.c.l.s4 1934713408
        %v1998 = vunpack.c.0.s8 %v1997
        %v1999 = vlaneseq
        %v2000 = vshrl.u32 %v1999, 7
        %v2001 = vsub.s32 %v1998, %v2000
        %v2002 = vrot.slane %v1988, %v2001
        %v2003 = vcombine.low %v1970, %v1986
        %v2004 = vcombine.high %v1970, %v1986
        %v2006 = vunpack.c.l.s4 1934713408
        %v2007 = vunpack.c.0.s8 %v2006
        %v2008 = vlaneseq
        %v2009 = vshrl.u32 %v2008, 7
        %v2010 = vsub.s32 %v2007, %v2009
        %v2011 = vrot.slane %v2003, %v2010
        %v2013 = vunpack.c.l.s4 1934713408
        %v2014 = vunpack.c.0.s8 %v2013
        %v2015 = vlaneseq
        %v2016 = vshrl.u32 %v2015, 7
        %v2017 = vsub.s32 %v2014, %v2016
        %v2018 = vrot.slane %v2004, %v2017
        %v2019 = vcombine.high %v1995, 0.0
        %v2020 = vcombine.high %v2002, 0.0
        %v2021 = vcombine.high %v2011, 0.0
        %v2022 = vcombine.high %v2018, 0.0
        %2024 = vrot.lane.b32.xlu0 %v1951, 16
        %v2025 = vpop.permute.xlu0 %2024
        %2028 = vrot.lane.b32.xlu0 %v1934, 32
        %v2029 = vpop.permute.xlu0 %2028
        %2032 = vrot.lane.b32.xlu0 %v1952, 48
        %v2033 = vpop.permute.xlu0 %2032
        %2036 = vrot.lane.b32.xlu0 %v1943, 64
        %v2037 = vpop.permute.xlu0 %2036
        %2040 = vrot.lane.b32.xlu0 %v1953, 80
        %v2041 = vpop.permute.xlu0 %2040
        %2044 = vrot.lane.b32.xlu0 %v1950, 96
        %v2045 = vpop.permute.xlu0 %2044
        %2048 = vrot.lane.b32.xlu0 %v1954, 112
        %v2049 = vpop.permute.xlu0 %2048
        %2052 = vrot.lane.b32.xlu0 %v2019, 16
        %v2053 = vpop.permute.xlu0 %2052
        %2056 = vrot.lane.b32.xlu0 %v2002, 32
        %v2057 = vpop.permute.xlu0 %2056
        %2060 = vrot.lane.b32.xlu0 %v2020, 48
        %v2061 = vpop.permute.xlu0 %2060
        %2064 = vrot.lane.b32.xlu0 %v2011, 64
        %v2065 = vpop.permute.xlu0 %2064
        %2068 = vrot.lane.b32.xlu0 %v2021, 80
        %v2069 = vpop.permute.xlu0 %2068
        %2072 = vrot.lane.b32.xlu0 %v2018, 96
        %v2073 = vpop.permute.xlu0 %2072
        %2076 = vrot.lane.b32.xlu0 %v2022, 112
        %v2077 = vpop.permute.xlu0 %2076
        %v2079 = vsel %vm613, %v1927, %v2025
        %v2080 = vsel %vm615, %v2079, %v2029
        %v2081 = vsel %vm617, %v2080, %v2033
        %v2082 = vsel %vm619, %v2081, %v2037
        %v2083 = vsel %vm621, %v2082, %v2041
        %v2084 = vsel %vm623, %v2083, %v2045
        %v2085 = vsel %vm625, %v2084, %v2049
        %v2086 = vsel %vm613, %v1995, %v2053
        %v2087 = vsel %vm615, %v2086, %v2057
        %v2088 = vsel %vm617, %v2087, %v2061
        %v2089 = vsel %vm619, %v2088, %v2065
        %v2090 = vsel %vm621, %v2089, %v2069
        %v2091 = vsel %vm623, %v2090, %v2073
        %v2092 = vsel %vm625, %v2091, %v2077
        %v2093 = vpack.c.bf16 %v2085, %v2085
        %v2094 = vpack.c.bf16 %v2092, %v2092
        %v2097 = vunpack.c.l.b16 %v2093
        %v2098 = vunpack.c.l.b16 %v2094
        %v2099 = vpack.c.b16 %v2098, %v2097
        %2101 = vst [vmem:[#allocation3 + $0x18] sm:$0x33] %v2099
        %2102 = vrot.lane.b32.xlu0 %v1861, 127
        %v2103 = vpop.permute.xlu0 %2102
        %2104 = vrot.lane.b32.xlu0 %v1863, 127
        %v2105 = vpop.permute.xlu0 %2104
        %2106 = vrot.lane.b32.xlu0 %v1866, 127
        %v2107 = vpop.permute.xlu0 %2106
        %2108 = vrot.lane.b32.xlu0 %v1868, 127
        %v2109 = vpop.permute.xlu0 %2108
        %2110 = vrot.lane.b32.xlu0 %v1871, 127
        %v2111 = vpop.permute.xlu0 %2110
        %2112 = vrot.lane.b32.xlu0 %v1873, 127
        %v2113 = vpop.permute.xlu0 %2112
        %2114 = vrot.lane.b32.xlu0 %v1876, 127
        %v2115 = vpop.permute.xlu0 %2114
        %2116 = vrot.lane.b32.xlu0 %v1878, 127
        %v2117 = vpop.permute.xlu0 %2116
        %v2126 = vcombine.low %v2103, %v2111
        %v2127 = vcombine.high %v2103, %v2111
        %v2129 = vunpack.c.l.s4 1983009808
        %v2130 = vunpack.c.0.s8 %v2129
        %v2131 = vlaneseq
        %v2132 = vshrl.u32 %v2131, 7
        %v2133 = vsub.s32 %v2130, %v2132
        %v2134 = vrot.slane %v2126, %v2133
        %v2136 = vunpack.c.l.s4 1983009808
        %v2137 = vunpack.c.0.s8 %v2136
        %v2138 = vlaneseq
        %v2139 = vshrl.u32 %v2138, 7
        %v2140 = vsub.s32 %v2137, %v2139
        %v2141 = vrot.slane %v2127, %v2140
        %v2142 = vcombine.low %v2107, %v2115
        %v2143 = vcombine.high %v2107, %v2115
        %v2145 = vunpack.c.l.s4 1983009808
        %v2146 = vunpack.c.0.s8 %v2145
        %v2147 = vlaneseq
        %v2148 = vshrl.u32 %v2147, 7
        %v2149 = vsub.s32 %v2146, %v2148
        %v2150 = vrot.slane %v2142, %v2149
        %v2152 = vunpack.c.l.s4 1983009808
        %v2153 = vunpack.c.0.s8 %v2152
        %v2154 = vlaneseq
        %v2155 = vshrl.u32 %v2154, 7
        %v2156 = vsub.s32 %v2153, %v2155
        %v2157 = vrot.slane %v2143, %v2156
        %v2158 = vcombine.low %v2134, %v2150
        %v2159 = vcombine.high %v2134, %v2150
        %v2161 = vunpack.c.l.s4 1934713408
        %v2162 = vunpack.c.0.s8 %v2161
        %v2163 = vlaneseq
        %v2164 = vshrl.u32 %v2163, 7
        %v2165 = vsub.s32 %v2162, %v2164
        %v2166 = vrot.slane %v2158, %v2165
        %v2168 = vunpack.c.l.s4 1934713408
        %v2169 = vunpack.c.0.s8 %v2168
        %v2170 = vlaneseq
        %v2171 = vshrl.u32 %v2170, 7
        %v2172 = vsub.s32 %v2169, %v2171
        %v2173 = vrot.slane %v2159, %v2172
        %v2174 = vcombine.low %v2141, %v2157
        %v2175 = vcombine.high %v2141, %v2157
        %v2177 = vunpack.c.l.s4 1934713408
        %v2178 = vunpack.c.0.s8 %v2177
        %v2179 = vlaneseq
        %v2180 = vshrl.u32 %v2179, 7
        %v2181 = vsub.s32 %v2178, %v2180
        %v2182 = vrot.slane %v2174, %v2181
        %v2184 = vunpack.c.l.s4 1934713408
        %v2185 = vunpack.c.0.s8 %v2184
        %v2186 = vlaneseq
        %v2187 = vshrl.u32 %v2186, 7
        %v2188 = vsub.s32 %v2185, %v2187
        %v2189 = vrot.slane %v2175, %v2188
        %v2190 = vcombine.high %v2166, 0.0
        %v2191 = vcombine.high %v2173, 0.0
        %v2192 = vcombine.high %v2182, 0.0
        %v2193 = vcombine.high %v2189, 0.0
        %v2194 = vcombine.low %v2105, %v2113
        %v2195 = vcombine.high %v2105, %v2113
        %v2197 = vunpack.c.l.s4 1983009808
        %v2198 = vunpack.c.0.s8 %v2197
        %v2199 = vlaneseq
        %v2200 = vshrl.u32 %v2199, 7
        %v2201 = vsub.s32 %v2198, %v2200
        %v2202 = vrot.slane %v2194, %v2201
        %v2204 = vunpack.c.l.s4 1983009808
        %v2205 = vunpack.c.0.s8 %v2204
        %v2206 = vlaneseq
        %v2207 = vshrl.u32 %v2206, 7
        %v2208 = vsub.s32 %v2205, %v2207
        %v2209 = vrot.slane %v2195, %v2208
        %v2210 = vcombine.low %v2109, %v2117
        %v2211 = vcombine.high %v2109, %v2117
        %v2213 = vunpack.c.l.s4 1983009808
        %v2214 = vunpack.c.0.s8 %v2213
        %v2215 = vlaneseq
        %v2216 = vshrl.u32 %v2215, 7
        %v2217 = vsub.s32 %v2214, %v2216
        %v2218 = vrot.slane %v2210, %v2217
        %v2220 = vunpack.c.l.s4 1983009808
        %v2221 = vunpack.c.0.s8 %v2220
        %v2222 = vlaneseq
        %v2223 = vshrl.u32 %v2222, 7
        %v2224 = vsub.s32 %v2221, %v2223
        %v2225 = vrot.slane %v2211, %v2224
        %v2226 = vcombine.low %v2202, %v2218
        %v2227 = vcombine.high %v2202, %v2218
        %v2229 = vunpack.c.l.s4 1934713408
        %v2230 = vunpack.c.0.s8 %v2229
        %v2231 = vlaneseq
        %v2232 = vshrl.u32 %v2231, 7
        %v2233 = vsub.s32 %v2230, %v2232
        %v2234 = vrot.slane %v2226, %v2233
        %v2236 = vunpack.c.l.s4 1934713408
        %v2237 = vunpack.c.0.s8 %v2236
        %v2238 = vlaneseq
        %v2239 = vshrl.u32 %v2238, 7
        %v2240 = vsub.s32 %v2237, %v2239
        %v2241 = vrot.slane %v2227, %v2240
        %v2242 = vcombine.low %v2209, %v2225
        %v2243 = vcombine.high %v2209, %v2225
        %v2245 = vunpack.c.l.s4 1934713408
        %v2246 = vunpack.c.0.s8 %v2245
        %v2247 = vlaneseq
        %v2248 = vshrl.u32 %v2247, 7
        %v2249 = vsub.s32 %v2246, %v2248
        %v2250 = vrot.slane %v2242, %v2249
        %v2252 = vunpack.c.l.s4 1934713408
        %v2253 = vunpack.c.0.s8 %v2252
        %v2254 = vlaneseq
        %v2255 = vshrl.u32 %v2254, 7
        %v2256 = vsub.s32 %v2253, %v2255
        %v2257 = vrot.slane %v2243, %v2256
        %v2258 = vcombine.high %v2234, 0.0
        %v2259 = vcombine.high %v2241, 0.0
        %v2260 = vcombine.high %v2250, 0.0
        %v2261 = vcombine.high %v2257, 0.0
        %2263 = vrot.lane.b32.xlu0 %v2190, 16
        %v2264 = vpop.permute.xlu0 %2263
        %2267 = vrot.lane.b32.xlu0 %v2173, 32
        %v2268 = vpop.permute.xlu0 %2267
        %2271 = vrot.lane.b32.xlu0 %v2191, 48
        %v2272 = vpop.permute.xlu0 %2271
        %2275 = vrot.lane.b32.xlu0 %v2182, 64
        %v2276 = vpop.permute.xlu0 %2275
        %2279 = vrot.lane.b32.xlu0 %v2192, 80
        %v2280 = vpop.permute.xlu0 %2279
        %2283 = vrot.lane.b32.xlu0 %v2189, 96
        %v2284 = vpop.permute.xlu0 %2283
        %2287 = vrot.lane.b32.xlu0 %v2193, 112
        %v2288 = vpop.permute.xlu0 %2287
        %2291 = vrot.lane.b32.xlu0 %v2258, 16
        %v2292 = vpop.permute.xlu0 %2291
        %2295 = vrot.lane.b32.xlu0 %v2241, 32
        %v2296 = vpop.permute.xlu0 %2295
        %2299 = vrot.lane.b32.xlu0 %v2259, 48
        %v2300 = vpop.permute.xlu0 %2299
        %2303 = vrot.lane.b32.xlu0 %v2250, 64
        %v2304 = vpop.permute.xlu0 %2303
        %2307 = vrot.lane.b32.xlu0 %v2260, 80
        %v2308 = vpop.permute.xlu0 %2307
        %2311 = vrot.lane.b32.xlu0 %v2257, 96
        %v2312 = vpop.permute.xlu0 %2311
        %2315 = vrot.lane.b32.xlu0 %v2261, 112
        %v2316 = vpop.permute.xlu0 %2315
        %v2318 = vsel %vm613, %v2166, %v2264
        %v2319 = vsel %vm615, %v2318, %v2268
        %v2320 = vsel %vm617, %v2319, %v2272
        %v2321 = vsel %vm619, %v2320, %v2276
        %v2322 = vsel %vm621, %v2321, %v2280
        %v2323 = vsel %vm623, %v2322, %v2284
        %v2324 = vsel %vm625, %v2323, %v2288
        %v2325 = vsel %vm613, %v2234, %v2292
        %v2326 = vsel %vm615, %v2325, %v2296
        %v2327 = vsel %vm617, %v2326, %v2300
        %v2328 = vsel %vm619, %v2327, %v2304
        %v2329 = vsel %vm621, %v2328, %v2308
        %v2330 = vsel %vm623, %v2329, %v2312
        %v2331 = vsel %vm625, %v2330, %v2316
        %v2332 = vpack.c.bf16 %v2324, %v2324
        %v2333 = vpack.c.bf16 %v2331, %v2331
        %v2336 = vunpack.c.l.b16 %v2332
        %v2337 = vunpack.c.l.b16 %v2333
        %v2338 = vpack.c.b16 %v2337, %v2336
        %v2339 = vrot.slane %v2338, 6
        %2341 = vst [vmem:[#allocation3 + $0x18] sm:$0xcc] %v2339
        %2342 = vrot.lane.b32.xlu0 %v1861, 126
        %v2343 = vpop.permute.xlu0 %2342
        %2344 = vrot.lane.b32.xlu0 %v1863, 126
        %v2345 = vpop.permute.xlu0 %2344
        %2346 = vrot.lane.b32.xlu0 %v1866, 126
        %v2347 = vpop.permute.xlu0 %2346
        %2348 = vrot.lane.b32.xlu0 %v1868, 126
        %v2349 = vpop.permute.xlu0 %2348
        %2350 = vrot.lane.b32.xlu0 %v1871, 126
        %v2351 = vpop.permute.xlu0 %2350
        %2352 = vrot.lane.b32.xlu0 %v1873, 126
        %v2353 = vpop.permute.xlu0 %2352
        %2354 = vrot.lane.b32.xlu0 %v1876, 126
        %v2355 = vpop.permute.xlu0 %2354
        %2356 = vrot.lane.b32.xlu0 %v1878, 126
        %v2357 = vpop.permute.xlu0 %2356
        %v2366 = vcombine.low %v2343, %v2351
        %v2367 = vcombine.high %v2343, %v2351
        %v2369 = vunpack.c.l.s4 1983009808
        %v2370 = vunpack.c.0.s8 %v2369
        %v2371 = vlaneseq
        %v2372 = vshrl.u32 %v2371, 7
        %v2373 = vsub.s32 %v2370, %v2372
        %v2374 = vrot.slane %v2366, %v2373
        %v2376 = vunpack.c.l.s4 1983009808
        %v2377 = vunpack.c.0.s8 %v2376
        %v2378 = vlaneseq
        %v2379 = vshrl.u32 %v2378, 7
        %v2380 = vsub.s32 %v2377, %v2379
        %v2381 = vrot.slane %v2367, %v2380
        %v2382 = vcombine.low %v2347, %v2355
        %v2383 = vcombine.high %v2347, %v2355
        %v2385 = vunpack.c.l.s4 1983009808
        %v2386 = vunpack.c.0.s8 %v2385
        %v2387 = vlaneseq
        %v2388 = vshrl.u32 %v2387, 7
        %v2389 = vsub.s32 %v2386, %v2388
        %v2390 = vrot.slane %v2382, %v2389
        %v2392 = vunpack.c.l.s4 1983009808
        %v2393 = vunpack.c.0.s8 %v2392
        %v2394 = vlaneseq
        %v2395 = vshrl.u32 %v2394, 7
        %v2396 = vsub.s32 %v2393, %v2395
        %v2397 = vrot.slane %v2383, %v2396
        %v2398 = vcombine.low %v2374, %v2390
        %v2399 = vcombine.high %v2374, %v2390
        %v2401 = vunpack.c.l.s4 1934713408
        %v2402 = vunpack.c.0.s8 %v2401
        %v2403 = vlaneseq
        %v2404 = vshrl.u32 %v2403, 7
        %v2405 = vsub.s32 %v2402, %v2404
        %v2406 = vrot.slane %v2398, %v2405
        %v2408 = vunpack.c.l.s4 1934713408
        %v2409 = vunpack.c.0.s8 %v2408
        %v2410 = vlaneseq
        %v2411 = vshrl.u32 %v2410, 7
        %v2412 = vsub.s32 %v2409, %v2411
        %v2413 = vrot.slane %v2399, %v2412
        %v2414 = vcombine.low %v2381, %v2397
        %v2415 = vcombine.high %v2381, %v2397
        %v2417 = vunpack.c.l.s4 1934713408
        %v2418 = vunpack.c.0.s8 %v2417
        %v2419 = vlaneseq
        %v2420 = vshrl.u32 %v2419, 7
        %v2421 = vsub.s32 %v2418, %v2420
        %v2422 = vrot.slane %v2414, %v2421
        %v2424 = vunpack.c.l.s4 1934713408
        %v2425 = vunpack.c.0.s8 %v2424
        %v2426 = vlaneseq
        %v2427 = vshrl.u32 %v2426, 7
        %v2428 = vsub.s32 %v2425, %v2427
        %v2429 = vrot.slane %v2415, %v2428
        %v2430 = vcombine.high %v2406, 0.0
        %v2431 = vcombine.high %v2413, 0.0
        %v2432 = vcombine.high %v2422, 0.0
        %v2433 = vcombine.high %v2429, 0.0
        %v2434 = vcombine.low %v2345, %v2353
        %v2435 = vcombine.high %v2345, %v2353
        %v2437 = vunpack.c.l.s4 1983009808
        %v2438 = vunpack.c.0.s8 %v2437
        %v2439 = vlaneseq
        %v2440 = vshrl.u32 %v2439, 7
        %v2441 = vsub.s32 %v2438, %v2440
        %v2442 = vrot.slane %v2434, %v2441
        %v2444 = vunpack.c.l.s4 1983009808
        %v2445 = vunpack.c.0.s8 %v2444
        %v2446 = vlaneseq
        %v2447 = vshrl.u32 %v2446, 7
        %v2448 = vsub.s32 %v2445, %v2447
        %v2449 = vrot.slane %v2435, %v2448
        %v2450 = vcombine.low %v2349, %v2357
        %v2451 = vcombine.high %v2349, %v2357
        %v2453 = vunpack.c.l.s4 1983009808
        %v2454 = vunpack.c.0.s8 %v2453
        %v2455 = vlaneseq
        %v2456 = vshrl.u32 %v2455, 7
        %v2457 = vsub.s32 %v2454, %v2456
        %v2458 = vrot.slane %v2450, %v2457
        %v2460 = vunpack.c.l.s4 1983009808
        %v2461 = vunpack.c.0.s8 %v2460
        %v2462 = vlaneseq
        %v2463 = vshrl.u32 %v2462, 7
        %v2464 = vsub.s32 %v2461, %v2463
        %v2465 = vrot.slane %v2451, %v2464
        %v2466 = vcombine.low %v2442, %v2458
        %v2467 = vcombine.high %v2442, %v2458
        %v2469 = vunpack.c.l.s4 1934713408
        %v2470 = vunpack.c.0.s8 %v2469
        %v2471 = vlaneseq
        %v2472 = vshrl.u32 %v2471, 7
        %v2473 = vsub.s32 %v2470, %v2472
        %v2474 = vrot.slane %v2466, %v2473
        %v2476 = vunpack.c.l.s4 1934713408
        %v2477 = vunpack.c.0.s8 %v2476
        %v2478 = vlaneseq
        %v2479 = vshrl.u32 %v2478, 7
        %v2480 = vsub.s32 %v2477, %v2479
        %v2481 = vrot.slane %v2467, %v2480
        %v2482 = vcombine.low %v2449, %v2465
        %v2483 = vcombine.high %v2449, %v2465
        %v2485 = vunpack.c.l.s4 1934713408
        %v2486 = vunpack.c.0.s8 %v2485
        %v2487 = vlaneseq
        %v2488 = vshrl.u32 %v2487, 7
        %v2489 = vsub.s32 %v2486, %v2488
        %v2490 = vrot.slane %v2482, %v2489
        %v2492 = vunpack.c.l.s4 1934713408
        %v2493 = vunpack.c.0.s8 %v2492
        %v2494 = vlaneseq
        %v2495 = vshrl.u32 %v2494, 7
        %v2496 = vsub.s32 %v2493, %v2495
        %v2497 = vrot.slane %v2483, %v2496
        %v2498 = vcombine.high %v2474, 0.0
        %v2499 = vcombine.high %v2481, 0.0
        %v2500 = vcombine.high %v2490, 0.0
        %v2501 = vcombine.high %v2497, 0.0
        %2503 = vrot.lane.b32.xlu0 %v2430, 16
        %v2504 = vpop.permute.xlu0 %2503
        %2507 = vrot.lane.b32.xlu0 %v2413, 32
        %v2508 = vpop.permute.xlu0 %2507
        %2511 = vrot.lane.b32.xlu0 %v2431, 48
        %v2512 = vpop.permute.xlu0 %2511
        %2515 = vrot.lane.b32.xlu0 %v2422, 64
        %v2516 = vpop.permute.xlu0 %2515
        %2519 = vrot.lane.b32.xlu0 %v2432, 80
        %v2520 = vpop.permute.xlu0 %2519
        %2523 = vrot.lane.b32.xlu0 %v2429, 96
        %v2524 = vpop.permute.xlu0 %2523
        %2527 = vrot.lane.b32.xlu0 %v2433, 112
        %v2528 = vpop.permute.xlu0 %2527
        %2531 = vrot.lane.b32.xlu0 %v2498, 16
        %v2532 = vpop.permute.xlu0 %2531
        %2535 = vrot.lane.b32.xlu0 %v2481, 32
        %v2536 = vpop.permute.xlu0 %2535
        %2539 = vrot.lane.b32.xlu0 %v2499, 48
        %v2540 = vpop.permute.xlu0 %2539
        %2543 = vrot.lane.b32.xlu0 %v2490, 64
        %v2544 = vpop.permute.xlu0 %2543
        %2547 = vrot.lane.b32.xlu0 %v2500, 80
        %v2548 = vpop.permute.xlu0 %2547
        %2551 = vrot.lane.b32.xlu0 %v2497, 96
        %v2552 = vpop.permute.xlu0 %2551
        %2555 = vrot.lane.b32.xlu0 %v2501, 112
        %v2556 = vpop.permute.xlu0 %2555
        %v2558 = vsel %vm613, %v2406, %v2504
        %v2559 = vsel %vm615, %v2558, %v2508
        %v2560 = vsel %vm617, %v2559, %v2512
        %v2561 = vsel %vm619, %v2560, %v2516
        %v2562 = vsel %vm621, %v2561, %v2520
        %v2563 = vsel %vm623, %v2562, %v2524
        %v2564 = vsel %vm625, %v2563, %v2528
        %v2565 = vsel %vm613, %v2474, %v2532
        %v2566 = vsel %vm615, %v2565, %v2536
        %v2567 = vsel %vm617, %v2566, %v2540
        %v2568 = vsel %vm619, %v2567, %v2544
        %v2569 = vsel %vm621, %v2568, %v2548
        %v2570 = vsel %vm623, %v2569, %v2552
        %v2571 = vsel %vm625, %v2570, %v2556
        %v2572 = vpack.c.bf16 %v2564, %v2564
        %v2573 = vpack.c.bf16 %v2571, %v2571
        %v2576 = vunpack.c.l.b16 %v2572
        %v2577 = vunpack.c.l.b16 %v2573
        %v2578 = vpack.c.b16 %v2577, %v2576
        %2580 = vst [vmem:[#allocation3 + $0x20] sm:$0x33] %v2578
        %v2581 = vld [vmem:[%s3] sm:$0xf]
        %v2582 = vld [vmem:[#allocation3] sm:$0xff]
        %v2583 = vld [vmem:[#allocation3 + $0x8] sm:$0xff]
        %v2584 = vld [vmem:[#allocation3 + $0x10] sm:$0xff]
        %v2585 = vld [vmem:[#allocation3 + $0x18] sm:$0xff]
        %v2586 = vld [vmem:[#allocation3 + $0x20] sm:$0xff]
        %v2587 = vld [vmem:[#allocation3 + $0x28] sm:$0xff]
        %v2588 = vld [vmem:[#allocation3 + $0x30] sm:$0xff]
        %v2589 = vld [vmem:[#allocation3 + $0x38] sm:$0xff]
        %v2590 = vld [vmem:[#allocation3 + $0x40] sm:$0xff]
        %v2591 = vld [vmem:[#allocation3 + $0x48] sm:$0xff]
        %v2592 = vld [vmem:[#allocation3 + $0x50] sm:$0xff]
        %v2593 = vld [vmem:[#allocation3 + $0x58] sm:$0xff]
        %v2594 = vld [vmem:[#allocation3 + $0x60] sm:$0xff]
        %v2595 = vld [vmem:[#allocation3 + $0x68] sm:$0xff]
        %v2596 = vld [vmem:[#allocation3 + $0x70] sm:$0xff]
        %v2597 = vld [vmem:[#allocation3 + $0x78] sm:$0xff]
        %v2614 = vunpack.c.l.b16 %v2582
        %v2615 = vunpack.c.h.b16 %v2582
        %v2616 = vunpack.c.l.b16 %v2583
        %v2617 = vunpack.c.h.b16 %v2583
        %v2618 = vunpack.c.l.b16 %v2584
        %v2619 = vunpack.c.h.b16 %v2584
        %v2620 = vunpack.c.l.b16 %v2585
        %v2621 = vunpack.c.h.b16 %v2585
        %v2622 = vunpack.c.l.b16 %v2586
        %v2623 = vunpack.c.h.b16 %v2586
        %v2624 = vunpack.c.l.b16 %v2587
        %v2625 = vunpack.c.h.b16 %v2587
        %v2626 = vunpack.c.l.b16 %v2588
        %v2627 = vunpack.c.h.b16 %v2588
        %v2628 = vunpack.c.l.b16 %v2589
        %v2629 = vunpack.c.h.b16 %v2589
        %v2630 = vunpack.c.l.b16 %v2590
        %v2631 = vunpack.c.h.b16 %v2590
        %v2632 = vunpack.c.l.b16 %v2591
        %v2633 = vunpack.c.h.b16 %v2591
        %v2634 = vunpack.c.l.b16 %v2592
        %v2635 = vunpack.c.h.b16 %v2592
        %v2636 = vunpack.c.l.b16 %v2593
        %v2637 = vunpack.c.h.b16 %v2593
        %v2638 = vunpack.c.l.b16 %v2594
        %v2639 = vunpack.c.h.b16 %v2594
        %v2640 = vunpack.c.l.b16 %v2595
        %v2641 = vunpack.c.h.b16 %v2595
        %v2642 = vunpack.c.l.b16 %v2596
        %v2643 = vunpack.c.h.b16 %v2596
        %v2644 = vunpack.c.l.b16 %v2597
        %v2645 = vunpack.c.h.b16 %v2597
        %v2646 = vpack.c.b16 %v2616, %v2614
        %v2647 = vpack.c.b16 %v2617, %v2615
        %v2648 = vpack.c.b16 %v2620, %v2618
        %v2649 = vpack.c.b16 %v2621, %v2619
        %v2650 = vpack.c.b16 %v2624, %v2622
        %v2651 = vpack.c.b16 %v2625, %v2623
        %v2652 = vpack.c.b16 %v2628, %v2626
        %v2653 = vpack.c.b16 %v2629, %v2627
        %v2654 = vpack.c.b16 %v2632, %v2630
        %v2655 = vpack.c.b16 %v2633, %v2631
        %v2656 = vpack.c.b16 %v2636, %v2634
        %v2657 = vpack.c.b16 %v2637, %v2635
        %v2658 = vpack.c.b16 %v2640, %v2638
        %v2659 = vpack.c.b16 %v2641, %v2639
        %v2660 = vpack.c.b16 %v2644, %v2642
        %v2661 = vpack.c.b16 %v2645, %v2643
        %2678 = vmatprep.subr.bf16.mxu0 %v2661
        %2679 = vmatpush1.bf16.msra.mxu0 %v2660
        %2680 = vmatprep.subr.bf16.mxu0 %v2659
        %2681 = vmatpush1.bf16.msra.mxu0 %v2658
        %2682 = vmatprep.subr.bf16.mxu0 %v2657
        %2683 = vmatpush1.bf16.msra.mxu0 %v2656
        %2684 = vmatprep.subr.bf16.mxu0 %v2655
        %2685 = vmatpush1.bf16.msra.mxu0 %v2654
        %2686 = vmatprep.subr.bf16.mxu0 %v2653
        %2687 = vmatpush1.bf16.msra.mxu0 %v2652
        %2688 = vmatprep.subr.bf16.mxu0 %v2651
        %2689 = vmatpush1.bf16.msra.mxu0 %v2650
        %2690 = vmatprep.subr.bf16.mxu0 %v2649
        %2691 = vmatpush1.bf16.msra.mxu0 %v2648
        %2692 = vmatprep.subr.bf16.mxu0 %v2647
        %2693 = vmatpush1.bf16.msra.mxu0 %v2646
        %2694 = vmatprep.subr.bf16.mxu0 0
        %2695 = vmatpush2.bf16.msra.mxu0 0
        %2696 = vmatprep.subr.bf16.mxu0 0
        %2697 = vmatpush2.bf16.msra.mxu0 0
        %2698 = vmatprep.subr.bf16.mxu0 0
        %2699 = vmatpush2.bf16.msra.mxu0 0
        %2700 = vmatprep.subr.bf16.mxu0 0
        %2701 = vmatpush2.bf16.msra.mxu0 0
        %2702 = vmatprep.subr.bf16.mxu0 0
        %2703 = vmatpush2.bf16.msra.mxu0 0
        %2704 = vmatprep.subr.bf16.mxu0 0
        %2705 = vmatpush2.bf16.msra.mxu0 0
        %2706 = vmatprep.subr.bf16.mxu0 0
        %2707 = vmatpush2.bf16.msra.mxu0 0
        %2708 = vmatprep.subr.bf16.mxu0 0
        %2709 = vmatpush2.bf16.msra.mxu0 0
        %2710 = vmatprep.mubr.bf16.mxu0 0
        %2711 = vmatmul.mubr.bf16.gmra.mxu0 %v2581
        %v2712 = vpop.f32.mrf.mxu0
        %v2713 = vadd.f32 0.0, %v2712
        %v2714 = vpop.f32.mrf.mxu0
        %v2715 = vadd.f32 0.0, %v2714
        %v2716 = vpop.f32.mrf.mxu0
        %v2717 = vpop.f32.mrf.mxu0
        %2718 = vdwg.mxu0
        %2719 = vst [vmem:[%s215] sm:$0xff] %v2713
        %2720 = vst [vmem:[%s215 + $0x8] sm:$0xff] %v2715
        %s2721 = sand.u32 %s118, 1
        %s2722 = scalar_lea.sflag [#allocation6], %s2721
        %s2723 = sand.u32 %s118, 1
        %s2724 = smul.addr %s2723, 16
        %s2725 = scalar_lea.vmem [#allocation7], %s2724
        // Predicated region
        $region41: #{tpu_custom_call.1} parent=35 // pred_check
          %p2726 = pneg %p128
        $region42: #{tpu_custom_call.1} parent=35 // pred_check_branch
          %2728 = sbr.rel (%p2726) target = $region44
        $region43: #{tpu_custom_call.1} parent=35 // pred_region
          %s2730 = ssub.s32 256, 256
          %2731 = vsyncadd %s2722, %s2730
          %s2732 = smul.addr %s21, 2
          %s2733 = smul.addr %s2732, 128
          %s2734 = scalar_lea.hbm %s4, %s2733
          %s2736 = sshll.u32 %s2725, 4
          %s2737 = int_to_ptr.vmem [resolvable:$true] %s2736
          %2739 = dma.vmem_to_hbm [thread:$0]  %s2737, 256, %s2734, %s2722
        $region44: #{tpu_custom_call.1} parent=35 // pred_fallthru
          _
      $region36: #{tpu_custom_call.1} parent=5 // pred_fallthru
        _
      %p2740 = scmp.le.s32.totalorder 2, %s16
      // Predicated region
      $region45: #{tpu_custom_call.1} parent=5 // pred_check
        %p2741 = pneg %p2740
      $region46: #{tpu_custom_call.1} parent=5 // pred_check_branch
        %2743 = sbr.rel (%p2741) target = $region48
      $region47: #{tpu_custom_call.1} parent=5 // pred_region
        %s2744 = ssub.s32 %s16, 2
        // Predicated region
        $region49: #{tpu_custom_call.1} parent=47 // pred_check
          %p2745 = pneg %p134
        $region50: #{tpu_custom_call.1} parent=47 // pred_check_branch
          %2747 = sbr.rel (%p2745) target = $region52
        $region51: #{tpu_custom_call.1} parent=47 // pred_region
          %s2748 = sand.u32 %s119, 1
          %s2749 = scalar_lea.sflag [#allocation6], %s2748
          %s2750 = sand.u32 %s119, 1
          %s2751 = smul.addr %s2750, 16
          %s2752 = scalar_lea.vmem [#allocation7], %s2751
          %2753 = dma.done %s2749, 256
        $region52: #{tpu_custom_call.1} parent=47 // pred_fallthru
          _
      $region48: #{tpu_custom_call.1} parent=5 // pred_fallthru
        _
    $region6: #{tpu_custom_call.1} parent=1 // loop_footer
      %s20 = sadd.s32 1, %s16
    $region7: #{tpu_custom_call.1} parent=1 // loop_footer_branch
      %15 = sbr.rel target = $region3
    $region8: #{tpu_custom_call.1} parent=1 // loop_exit
      _
    %2754 = vsyncpa [#allocation5], 1
    %s2755 = scalar_lea.sflag [#allocation5], 1
    %2756 = vsyncpa %s2755, 1
    %2757 = vsyncpa [#allocation6], 1
    %s2758 = scalar_lea.sflag [#allocation6], 1
    %2759 = vsyncpa %s2758, 1

</llo_original>
